<compile_context>
chip_gen: v6e
topology: v6e:2x2x1
jax: 0.10.0
libtpu: 0.0.40
codegen_flags: <defaults>
</compile_context>

<pallas_src>
import jax
import jax.numpy as jnp
from jax import lax
from jax.experimental import pallas as pl
from jax.experimental.pallas import tpu as pltpu


def _divisors(n):
    return [d for d in range(1, n + 1) if n % d == 0]


# --------------------------------------------------------------------------
# Pass 1: fused MaxPool3d(2) + Conv3d(3x3x3, pad=1) + per-tile BN partials.
# One grid step = one batch element x `dpb` pooled output depths.
# --------------------------------------------------------------------------
def _make_pool_conv_kernel(dpb, hp, wp):
    wpad = wp + 2                 # padded pooled width of the flat planes
    span = hp * wpad              # flattened output span (incl. pad columns)

    def kernel(*refs):
        # refs: dpb+2 input slabs, weight, conv out, stats out.
        x_refs = refs[:dpb + 2]
        w_ref = refs[dpb + 2]
        conv_ref = refs[dpb + 3]
        stats_ref = refs[dpb + 4]

        # ---- fused MaxPool3d(2): reduce the 8 pool phases of each padded,
        #      flattened plane (pure VPU maxima), then take the 9 (kh, kw)
        #      conv taps as contiguous lane slices of the flat plane. ---------
        rows = []
        for xr in x_refs:
            plane = xr[0, 0, 0]                       # (Cin, Hpad*Wpad) bf16
            for p in range(1, 8):
                plane = jnp.maximum(plane, xr[0, 0, p])
            for kh in range(3):
                for kw in range(3):
                    off = kh * wpad + kw
                    rows.append(plane[:, off:off + span])   # (Cin, span)

        w2 = w_ref[...]                               # (Cout, 27*Cin) bf16
        outs = []
        for dd in range(dpb):                         # output depths this step
            # 27 taps (3 pooled planes x 9 spatial taps) -> one MXU matmul.
            pmat = jnp.concatenate(rows[dd * 9:(dd + 3) * 9], axis=0)
            q = jnp.dot(w2, pmat, preferred_element_type=jnp.float32)
            # drop the Wpad-padding garbage columns -> (Cout, hp*wp), lane-dense
            outs.append(jnp.concatenate(
                [q[:, h * wpad:h * wpad + wp] for h in range(hp)], axis=1))
        acc = outs[0] if dpb == 1 else jnp.concatenate(outs, axis=1)

        # exact per-tile BN partial statistics in f32 (combined in the wrapper)
        stats_ref[0, 0] = jnp.concatenate(
            [jnp.sum(acc, axis=1, keepdims=True),
             jnp.sum(acc * acc, axis=1, keepdims=True)], axis=1)
        # pre-BN conv block, bf16, written directly in the final NC(DHW) layout
        conv_ref[0] = acc.astype(conv_ref.dtype)

    return kernel


# --------------------------------------------------------------------------
# Pass 2: folded BatchNorm (scale/shift) + ReLU -- pure elementwise stream
# with identical in/out blocks (no relayout), large lane-dense blocks.
# --------------------------------------------------------------------------
def _bn_relu_kernel(conv_ref, scale_ref, shift_ref, o_ref):
    y = conv_ref[0].astype(jnp.float32) * scale_ref[...] + shift_ref[...]
    o_ref[0] = jnp.maximum(y, 0.0)


# --------------------------------------------------------------------------
# Down.forward (MaxPool3d(2) -> Conv3d(3,pad=1) -> BN3d (batch stats) -> ReLU)
# --------------------------------------------------------------------------
def down_forward(x, params, eps=1e-5):
    N, Cin, D, H, W = x.shape
    if (D % 2) or (H % 2) or (W % 2):
        raise ValueError(f"MaxPool3d(2) requires even D/H/W, got {(D, H, W)}")
    Dp, Hp, Wp = D // 2, H // 2, W // 2
    HW = Hp * Wp
    Wpad = Wp + 2
    flat = (Hp + 3) * Wpad        # flattened padded-plane length
    weight, gamma, beta = params["w"], params["gamma"], params["beta"]
    Cout = weight.shape[0]
    # NOTE: params["b"] (Conv3d bias) is intentionally unused: under
    # training-mode BatchNorm it is exactly cancelled by mean subtraction.

    # ---- pooled-depth group size so conv-output blocks are lane-dense -------
    dpb = Dp
    for d in _divisors(Dp):
        if (d * HW) % 128 == 0:
            dpb = d
            break
    nb = Dp // dpb

    # ---- host prep (one fused XLA pass over x) ------------------------------
    # Split the 2x2x2 pool phases out as a leading axis of size 8, zero-pad by
    # one pooled cell (== the conv's padding=1 on the pooled tensor, plus one
    # spare H row so every (kh, kw) tap is a contiguous lane slice), flatten
    # (H, W) so the kernel never reshapes trailing dims, and cast to bf16.
    xr = x.reshape(N, Cin, Dp, 2, Hp, 2, Wp, 2)
    xr = jnp.transpose(xr, (0, 2, 3, 5, 7, 1, 4, 6))     # (N,Dp,2,2,2,Cin,Hp,Wp)
    xr = xr.reshape(N, Dp, 8, Cin, Hp, Wp)
    xp = jnp.pad(xr, ((0, 0), (1, 1), (0, 0), (0, 0), (1, 2), (1, 1)))
    xp = xp.astype(jnp.bfloat16).reshape(N, Dp + 2, 8, Cin, flat)

    # Weights: (Cout, Cin, 3,3,3) -> (Cout, 27*Cin), column order (kd,kh,kw,c).
    w2 = jnp.transpose(weight, (0, 2, 3, 4, 1)).reshape(Cout, 27 * Cin)
    w2 = w2.astype(jnp.bfloat16)

    def x_spec(j):
        return pl.BlockSpec(
            (1, 1, 8, Cin, flat),
            lambda n, b: (n, dpb * b + j, 0, 0, 0))

    kernel = _make_pool_conv_kernel(dpb, Hp, Wp)
    conv, stats = pl.pallas_call(
        kernel,
        grid=(N, nb),
        in_specs=[x_spec(j) for j in range(dpb + 2)]
        + [pl.BlockSpec((Cout, 27 * Cin), lambda n, b: (0, 0))],
        out_specs=[
            pl.BlockSpec((1, Cout, dpb * HW), lambda n, b: (n, 0, b)),
            pl.BlockSpec((1, 1, Cout, 2), lambda n, b: (n, b, 0, 0)),
        ],
        out_shape=[
            jax.ShapeDtypeStruct((N, Cout, Dp * HW), jnp.bfloat16),
            jax.ShapeDtypeStruct((N, nb, Cout, 2), jnp.float32),
        ],
        compiler_params=pltpu.CompilerParams(
            dimension_semantics=("parallel", "parallel"),
            vmem_limit_bytes=64 * 1024 * 1024),
    )(*([xp] * (dpb + 2)), w2)

    # ---- combine per-tile partials (Chan-style parallel variance combine) ---
    cnt_t = float(dpb * HW)
    total = float(N * Dp * HW)
    sum_t = stats[..., 0]                                # (N, nb, Cout)
    ssq_t = stats[..., 1]
    mean_t = sum_t / cnt_t
    m2_t = jnp.maximum(ssq_t - sum_t * mean_t, 0.0)
    mean = jnp.sum(sum_t, axis=(0, 1)) / total           # (Cout,)
    m2 = jnp.sum(m2_t, axis=(0, 1)) \
        + cnt_t * jnp.sum((mean_t - mean) ** 2, axis=(0, 1))
    var = m2 / total                                      # biased (training BN)
    scale = gamma * lax.rsqrt(var + eps)
    shift = beta - mean * scale

    # ---- pass 2 block size: large, lane-dense, under a modest VMEM budget ---
    budget = 4 * 1024 * 1024
    cands = [d for d in _divisors(Dp) if (d * HW) % 128 == 0 or d == Dp]
    fits = [d for d in cands if Cout * d * HW * 6 <= budget]
    dp2 = max(fits) if fits else min(cands)

    out = pl.pallas_call(
        _bn_relu_kernel,
        grid=(N, Dp // dp2),
        in_specs=[
            pl.BlockSpec((1, Cout, dp2 * HW), lambda n, b: (n, 0, b)),
            pl.BlockSpec((Cout, 1), lambda n, b: (0, 0)),
            pl.BlockSpec((Cout, 1), lambda n, b: (0, 0)),
        ],
        out_specs=pl.BlockSpec((1, Cout, dp2 * HW), lambda n, b: (n, 0, b)),
        out_shape=jax.ShapeDtypeStruct((N, Cout, Dp * HW), jnp.float32),
        compiler_params=pltpu.CompilerParams(
            dimension_semantics=("parallel", "parallel"),
            vmem_limit_bytes=64 * 1024 * 1024),
    )(conv, scale.reshape(Cout, 1).astype(jnp.float32),
      shift.reshape(Cout, 1).astype(jnp.float32))

    return out.reshape(N, Cout, Dp, Hp, Wp)               # NCDHW, free reshape


def init_down_params(key, in_ch, out_ch):
    # Deterministic init matching Down.__init__ (Conv3d k=3 pad=1, BatchNorm3d).
    kw, kb = jax.random.split(key)
    fan_in = in_ch * 27
    bound = 1.0 / jnp.sqrt(fan_in)
    w = jax.random.uniform(kw, (out_ch, in_ch, 3, 3, 3), jnp.float32, -bound, bound)
    b = jax.random.uniform(kb, (out_ch,), jnp.float32, -bound, bound)
    gamma = 1.0 + 0.01 * jnp.arange(out_ch, dtype=jnp.float32)
    beta = 0.05 * jnp.arange(out_ch, dtype=jnp.float32)
    return {"w": w, "b": b, "gamma": gamma, "beta": beta}


# --------------------------------------------------------------------------
# Pure-JAX reference (f32, with the conv bias -- demonstrates it cancels).
# --------------------------------------------------------------------------
def down_forward_ref(x, params, eps=1e-5):
    N, C, D, H, W = x.shape
    y = x.reshape(N, C, D // 2, 2, H // 2, 2, W // 2, 2).max(axis=(3, 5, 7))
    conv = lax.conv_general_dilated(
        y, params["w"], window_strides=(1, 1, 1),
        padding=((1, 1), (1, 1), (1, 1)),
        dimension_numbers=("NCDHW", "OIDHW", "NCDHW"))
    conv = conv + params["b"][None, :, None, None, None]
    mean = conv.mean(axis=(0, 2, 3, 4), keepdims=True)
    var = ((conv - mean) ** 2).mean(axis=(0, 2, 3, 4), keepdims=True)
    xhat = (conv - mean) * lax.rsqrt(var + eps)
    out = xhat * params["gamma"][None, :, None, None, None] \
        + params["beta"][None, :, None, None, None]
    return jnp.maximum(out, 0.0)


if __name__ == "__main__":
    key = jax.random.PRNGKey(0)
    k_x, k_p = jax.random.split(key)

    N, in_ch, out_ch = 2, 4, 8
    D = H = W = 16
    x = jax.random.normal(k_x, (N, in_ch, D, H, W), jnp.float32)
    params = init_down_params(k_p, in_ch, out_ch)

    fwd = jax.jit(down_forward)
    out = jax.block_until_ready(fwd(x, params))
    assert out.shape == (N, out_ch, D // 2, H // 2, W // 2), out.shape

    ref = jax.block_until_ready(down_forward_ref(x, params))
    max_err = float(jnp.max(jnp.abs(out - ref)))
    # bf16 MXU inputs and bf16 conv intermediate (f32 accumulation / f32 BN
    # statistics) -> relaxed tolerance vs the f32 reference.
    assert jnp.allclose(out, ref, atol=3e-2, rtol=3e-2), max_err

    print("KERNEL_OK")
</pallas_src>

<mosaic_0001>
module attributes {stable_mosaic.version = 11 : i64} {
  func.func @kernel(%arg0: i32, %arg1: i32, %arg2: memref<1x1x8x4x110xbf16, #tpu.memory_space<vmem>>, %arg3: memref<1x1x8x4x110xbf16, #tpu.memory_space<vmem>>, %arg4: memref<1x1x8x4x110xbf16, #tpu.memory_space<vmem>>, %arg5: memref<1x1x8x4x110xbf16, #tpu.memory_space<vmem>>, %arg6: memref<8x108xbf16, #tpu.memory_space<vmem>>, %arg7: memref<1x8x128xbf16, #tpu.memory_space<vmem>>, %arg8: memref<1x1x8x2xf32, #tpu.memory_space<vmem>>) attributes {dimension_semantics = [#tpu.dimension_semantics<parallel>, #tpu.dimension_semantics<parallel>], iteration_bounds = array<i64: 2, 4>, scalar_prefetch = 0 : i64, scratch_operands = 0 : i64, tpu.core_type = #tpu.core_type<tc>, window_params = [{transform_indices = @transform_0, window_bounds = array<i64: 1, 1, 8, 4, 110>}, {transform_indices = @transform_1, window_bounds = array<i64: 1, 1, 8, 4, 110>}, {transform_indices = @transform_2, window_bounds = array<i64: 1, 1, 8, 4, 110>}, {transform_indices = @transform_3, window_bounds = array<i64: 1, 1, 8, 4, 110>}, {pipeline_mode = #tpu.pipeline_mode<synchronous>, transform_indices = @transform_4, window_bounds = array<i64: 8, 108>}, {transform_indices = @transform_5, window_bounds = array<i64: 1, 8, 128>}, {transform_indices = @transform_6, window_bounds = array<i64: 1, 1, 8, 2>}]} {
    %c0 = arith.constant 0 : index
    %c0_0 = arith.constant 0 : index
    %c0_1 = arith.constant 0 : index
    %c0_2 = arith.constant 0 : index
    %c0_3 = arith.constant 0 : index
    %0 = vector.load %arg2[%c0, %c0_0, %c0_1, %c0_2, %c0_3] : memref<1x1x8x4x110xbf16, #tpu.memory_space<vmem>>, vector<1x1x1x4x110xbf16>
    %1 = vector.shape_cast %0 : vector<1x1x1x4x110xbf16> to vector<4x110xbf16>
    %c0_4 = arith.constant 0 : index
    %c0_5 = arith.constant 0 : index
    %c1 = arith.constant 1 : index
    %c0_6 = arith.constant 0 : index
    %c0_7 = arith.constant 0 : index
    %2 = vector.load %arg2[%c0_4, %c0_5, %c1, %c0_6, %c0_7] : memref<1x1x8x4x110xbf16, #tpu.memory_space<vmem>>, vector<1x1x1x4x110xbf16>
    %3 = vector.shape_cast %2 : vector<1x1x1x4x110xbf16> to vector<4x110xbf16>
    %4 = arith.maximumf %1, %3 : vector<4x110xbf16>
    %c0_8 = arith.constant 0 : index
    %c0_9 = arith.constant 0 : index
    %c2 = arith.constant 2 : index
    %c0_10 = arith.constant 0 : index
    %c0_11 = arith.constant 0 : index
    %5 = vector.load %arg2[%c0_8, %c0_9, %c2, %c0_10, %c0_11] : memref<1x1x8x4x110xbf16, #tpu.memory_space<vmem>>, vector<1x1x1x4x110xbf16>
    %6 = vector.shape_cast %5 : vector<1x1x1x4x110xbf16> to vector<4x110xbf16>
    %7 = arith.maximumf %4, %6 : vector<4x110xbf16>
    %c0_12 = arith.constant 0 : index
    %c0_13 = arith.constant 0 : index
    %c3 = arith.constant 3 : index
    %c0_14 = arith.constant 0 : index
    %c0_15 = arith.constant 0 : index
    %8 = vector.load %arg2[%c0_12, %c0_13, %c3, %c0_14, %c0_15] : memref<1x1x8x4x110xbf16, #tpu.memory_space<vmem>>, vector<1x1x1x4x110xbf16>
    %9 = vector.shape_cast %8 : vector<1x1x1x4x110xbf16> to vector<4x110xbf16>
    %10 = arith.maximumf %7, %9 : vector<4x110xbf16>
    %c0_16 = arith.constant 0 : index
    %c0_17 = arith.constant 0 : index
    %c4 = arith.constant 4 : index
    %c0_18 = arith.constant 0 : index
    %c0_19 = arith.constant 0 : index
    %11 = vector.load %arg2[%c0_16, %c0_17, %c4, %c0_18, %c0_19] : memref<1x1x8x4x110xbf16, #tpu.memory_space<vmem>>, vector<1x1x1x4x110xbf16>
    %12 = vector.shape_cast %11 : vector<1x1x1x4x110xbf16> to vector<4x110xbf16>
    %13 = arith.maximumf %10, %12 : vector<4x110xbf16>
    %c0_20 = arith.constant 0 : index
    %c0_21 = arith.constant 0 : index
    %c5 = arith.constant 5 : index
    %c0_22 = arith.constant 0 : index
    %c0_23 = arith.constant 0 : index
    %14 = vector.load %arg2[%c0_20, %c0_21, %c5, %c0_22, %c0_23] : memref<1x1x8x4x110xbf16, #tpu.memory_space<vmem>>, vector<1x1x1x4x110xbf16>
    %15 = vector.shape_cast %14 : vector<1x1x1x4x110xbf16> to vector<4x110xbf16>
    %16 = arith.maximumf %13, %15 : vector<4x110xbf16>
    %c0_24 = arith.constant 0 : index
    %c0_25 = arith.constant 0 : index
    %c6 = arith.constant 6 : index
    %c0_26 = arith.constant 0 : index
    %c0_27 = arith.constant 0 : index
    %17 = vector.load %arg2[%c0_24, %c0_25, %c6, %c0_26, %c0_27] : memref<1x1x8x4x110xbf16, #tpu.memory_space<vmem>>, vector<1x1x1x4x110xbf16>
    %18 = vector.shape_cast %17 : vector<1x1x1x4x110xbf16> to vector<4x110xbf16>
    %19 = arith.maximumf %16, %18 : vector<4x110xbf16>
    %c0_28 = arith.constant 0 : index
    %c0_29 = arith.constant 0 : index
    %c7 = arith.constant 7 : index
    %c0_30 = arith.constant 0 : index
    %c0_31 = arith.constant 0 : index
    %20 = vector.load %arg2[%c0_28, %c0_29, %c7, %c0_30, %c0_31] : memref<1x1x8x4x110xbf16, #tpu.memory_space<vmem>>, vector<1x1x1x4x110xbf16>
    %21 = vector.shape_cast %20 : vector<1x1x1x4x110xbf16> to vector<4x110xbf16>
    %22 = arith.maximumf %19, %21 : vector<4x110xbf16>
    %23 = vector.extract_strided_slice %22 {offsets = [0, 0], sizes = [4, 80], strides = [1, 1]} : vector<4x110xbf16> to vector<4x80xbf16>
    %24 = vector.extract_strided_slice %22 {offsets = [0, 1], sizes = [4, 80], strides = [1, 1]} : vector<4x110xbf16> to vector<4x80xbf16>
    %25 = vector.extract_strided_slice %22 {offsets = [0, 2], sizes = [4, 80], strides = [1, 1]} : vector<4x110xbf16> to vector<4x80xbf16>
    %26 = vector.extract_strided_slice %22 {offsets = [0, 10], sizes = [4, 80], strides = [1, 1]} : vector<4x110xbf16> to vector<4x80xbf16>
    %27 = vector.extract_strided_slice %22 {offsets = [0, 11], sizes = [4, 80], strides = [1, 1]} : vector<4x110xbf16> to vector<4x80xbf16>
    %28 = vector.extract_strided_slice %22 {offsets = [0, 12], sizes = [4, 80], strides = [1, 1]} : vector<4x110xbf16> to vector<4x80xbf16>
    %29 = vector.extract_strided_slice %22 {offsets = [0, 20], sizes = [4, 80], strides = [1, 1]} : vector<4x110xbf16> to vector<4x80xbf16>
    %30 = vector.extract_strided_slice %22 {offsets = [0, 21], sizes = [4, 80], strides = [1, 1]} : vector<4x110xbf16> to vector<4x80xbf16>
    %31 = vector.extract_strided_slice %22 {offsets = [0, 22], sizes = [4, 80], strides = [1, 1]} : vector<4x110xbf16> to vector<4x80xbf16>
    %c0_32 = arith.constant 0 : index
    %c0_33 = arith.constant 0 : index
    %c0_34 = arith.constant 0 : index
    %c0_35 = arith.constant 0 : index
    %c0_36 = arith.constant 0 : index
    %32 = vector.load %arg3[%c0_32, %c0_33, %c0_34, %c0_35, %c0_36] : memref<1x1x8x4x110xbf16, #tpu.memory_space<vmem>>, vector<1x1x1x4x110xbf16>
    %33 = vector.shape_cast %32 : vector<1x1x1x4x110xbf16> to vector<4x110xbf16>
    %c0_37 = arith.constant 0 : index
    %c0_38 = arith.constant 0 : index
    %c1_39 = arith.constant 1 : index
    %c0_40 = arith.constant 0 : index
    %c0_41 = arith.constant 0 : index
    %34 = vector.load %arg3[%c0_37, %c0_38, %c1_39, %c0_40, %c0_41] : memref<1x1x8x4x110xbf16, #tpu.memory_space<vmem>>, vector<1x1x1x4x110xbf16>
    %35 = vector.shape_cast %34 : vector<1x1x1x4x110xbf16> to vector<4x110xbf16>
    %36 = arith.maximumf %33, %35 : vector<4x110xbf16>
    %c0_42 = arith.constant 0 : index
    %c0_43 = arith.constant 0 : index
    %c2_44 = arith.constant 2 : index
    %c0_45 = arith.constant 0 : index
    %c0_46 = arith.constant 0 : index
    %37 = vector.load %arg3[%c0_42, %c0_43, %c2_44, %c0_45, %c0_46] : memref<1x1x8x4x110xbf16, #tpu.memory_space<vmem>>, vector<1x1x1x4x110xbf16>
    %38 = vector.shape_cast %37 : vector<1x1x1x4x110xbf16> to vector<4x110xbf16>
    %39 = arith.maximumf %36, %38 : vector<4x110xbf16>
    %c0_47 = arith.constant 0 : index
    %c0_48 = arith.constant 0 : index
    %c3_49 = arith.constant 3 : index
    %c0_50 = arith.constant 0 : index
    %c0_51 = arith.constant 0 : index
    %40 = vector.load %arg3[%c0_47, %c0_48, %c3_49, %c0_50, %c0_51] : memref<1x1x8x4x110xbf16, #tpu.memory_space<vmem>>, vector<1x1x1x4x110xbf16>
    %41 = vector.shape_cast %40 : vector<1x1x1x4x110xbf16> to vector<4x110xbf16>
    %42 = arith.maximumf %39, %41 : vector<4x110xbf16>
    %c0_52 = arith.constant 0 : index
    %c0_53 = arith.constant 0 : index
    %c4_54 = arith.constant 4 : index
    %c0_55 = arith.constant 0 : index
    %c0_56 = arith.constant 0 : index
    %43 = vector.load %arg3[%c0_52, %c0_53, %c4_54, %c0_55, %c0_56] : memref<1x1x8x4x110xbf16, #tpu.memory_space<vmem>>, vector<1x1x1x4x110xbf16>
    %44 = vector.shape_cast %43 : vector<1x1x1x4x110xbf16> to vector<4x110xbf16>
    %45 = arith.maximumf %42, %44 : vector<4x110xbf16>
    %c0_57 = arith.constant 0 : index
    %c0_58 = arith.constant 0 : index
    %c5_59 = arith.constant 5 : index
    %c0_60 = arith.constant 0 : index
    %c0_61 = arith.constant 0 : index
    %46 = vector.load %arg3[%c0_57, %c0_58, %c5_59, %c0_60, %c0_61] : memref<1x1x8x4x110xbf16, #tpu.memory_space<vmem>>, vector<1x1x1x4x110xbf16>
    %47 = vector.shape_cast %46 : vector<1x1x1x4x110xbf16> to vector<4x110xbf16>
    %48 = arith.maximumf %45, %47 : vector<4x110xbf16>
    %c0_62 = arith.constant 0 : index
    %c0_63 = arith.constant 0 : index
    %c6_64 = arith.constant 6 : index
    %c0_65 = arith.constant 0 : index
    %c0_66 = arith.constant 0 : index
    %49 = vector.load %arg3[%c0_62, %c0_63, %c6_64, %c0_65, %c0_66] : memref<1x1x8x4x110xbf16, #tpu.memory_space<vmem>>, vector<1x1x1x4x110xbf16>
    %50 = vector.shape_cast %49 : vector<1x1x1x4x110xbf16> to vector<4x110xbf16>
    %51 = arith.maximumf %48, %50 : vector<4x110xbf16>
    %c0_67 = arith.constant 0 : index
    %c0_68 = arith.constant 0 : index
    %c7_69 = arith.constant 7 : index
    %c0_70 = arith.constant 0 : index
    %c0_71 = arith.constant 0 : index
    %52 = vector.load %arg3[%c0_67, %c0_68, %c7_69, %c0_70, %c0_71] : memref<1x1x8x4x110xbf16, #tpu.memory_space<vmem>>, vector<1x1x1x4x110xbf16>
    %53 = vector.shape_cast %52 : vector<1x1x1x4x110xbf16> to vector<4x110xbf16>
    %54 = arith.maximumf %51, %53 : vector<4x110xbf16>
    %55 = vector.extract_strided_slice %54 {offsets = [0, 0], sizes = [4, 80], strides = [1, 1]} : vector<4x110xbf16> to vector<4x80xbf16>
    %56 = vector.extract_strided_slice %54 {offsets = [0, 1], sizes = [4, 80], strides = [1, 1]} : vector<4x110xbf16> to vector<4x80xbf16>
    %57 = vector.extract_strided_slice %54 {offsets = [0, 2], sizes = [4, 80], strides = [1, 1]} : vector<4x110xbf16> to vector<4x80xbf16>
    %58 = vector.extract_strided_slice %54 {offsets = [0, 10], sizes = [4, 80], strides = [1, 1]} : vector<4x110xbf16> to vector<4x80xbf16>
    %59 = vector.extract_strided_slice %54 {offsets = [0, 11], sizes = [4, 80], strides = [1, 1]} : vector<4x110xbf16> to vector<4x80xbf16>
    %60 = vector.extract_strided_slice %54 {offsets = [0, 12], sizes = [4, 80], strides = [1, 1]} : vector<4x110xbf16> to vector<4x80xbf16>
    %61 = vector.extract_strided_slice %54 {offsets = [0, 20], sizes = [4, 80], strides = [1, 1]} : vector<4x110xbf16> to vector<4x80xbf16>
    %62 = vector.extract_strided_slice %54 {offsets = [0, 21], sizes = [4, 80], strides = [1, 1]} : vector<4x110xbf16> to vector<4x80xbf16>
    %63 = vector.extract_strided_slice %54 {offsets = [0, 22], sizes = [4, 80], strides = [1, 1]} : vector<4x110xbf16> to vector<4x80xbf16>
    %c0_72 = arith.constant 0 : index
    %c0_73 = arith.constant 0 : index
    %c0_74 = arith.constant 0 : index
    %c0_75 = arith.constant 0 : index
    %c0_76 = arith.constant 0 : index
    %64 = vector.load %arg4[%c0_72, %c0_73, %c0_74, %c0_75, %c0_76] : memref<1x1x8x4x110xbf16, #tpu.memory_space<vmem>>, vector<1x1x1x4x110xbf16>
    %65 = vector.shape_cast %64 : vector<1x1x1x4x110xbf16> to vector<4x110xbf16>
    %c0_77 = arith.constant 0 : index
    %c0_78 = arith.constant 0 : index
    %c1_79 = arith.constant 1 : index
    %c0_80 = arith.constant 0 : index
    %c0_81 = arith.constant 0 : index
    %66 = vector.load %arg4[%c0_77, %c0_78, %c1_79, %c0_80, %c0_81] : memref<1x1x8x4x110xbf16, #tpu.memory_space<vmem>>, vector<1x1x1x4x110xbf16>
    %67 = vector.shape_cast %66 : vector<1x1x1x4x110xbf16> to vector<4x110xbf16>
    %68 = arith.maximumf %65, %67 : vector<4x110xbf16>
    %c0_82 = arith.constant 0 : index
    %c0_83 = arith.constant 0 : index
    %c2_84 = arith.constant 2 : index
    %c0_85 = arith.constant 0 : index
    %c0_86 = arith.constant 0 : index
    %69 = vector.load %arg4[%c0_82, %c0_83, %c2_84, %c0_85, %c0_86] : memref<1x1x8x4x110xbf16, #tpu.memory_space<vmem>>, vector<1x1x1x4x110xbf16>
    %70 = vector.shape_cast %69 : vector<1x1x1x4x110xbf16> to vector<4x110xbf16>
    %71 = arith.maximumf %68, %70 : vector<4x110xbf16>
    %c0_87 = arith.constant 0 : index
    %c0_88 = arith.constant 0 : index
    %c3_89 = arith.constant 3 : index
    %c0_90 = arith.constant 0 : index
    %c0_91 = arith.constant 0 : index
    %72 = vector.load %arg4[%c0_87, %c0_88, %c3_89, %c0_90, %c0_91] : memref<1x1x8x4x110xbf16, #tpu.memory_space<vmem>>, vector<1x1x1x4x110xbf16>
    %73 = vector.shape_cast %72 : vector<1x1x1x4x110xbf16> to vector<4x110xbf16>
    %74 = arith.maximumf %71, %73 : vector<4x110xbf16>
    %c0_92 = arith.constant 0 : index
    %c0_93 = arith.constant 0 : index
    %c4_94 = arith.constant 4 : index
    %c0_95 = arith.constant 0 : index
    %c0_96 = arith.constant 0 : index
    %75 = vector.load %arg4[%c0_92, %c0_93, %c4_94, %c0_95, %c0_96] : memref<1x1x8x4x110xbf16, #tpu.memory_space<vmem>>, vector<1x1x1x4x110xbf16>
    %76 = vector.shape_cast %75 : vector<1x1x1x4x110xbf16> to vector<4x110xbf16>
    %77 = arith.maximumf %74, %76 : vector<4x110xbf16>
    %c0_97 = arith.constant 0 : index
    %c0_98 = arith.constant 0 : index
    %c5_99 = arith.constant 5 : index
    %c0_100 = arith.constant 0 : index
    %c0_101 = arith.constant 0 : index
    %78 = vector.load %arg4[%c0_97, %c0_98, %c5_99, %c0_100, %c0_101] : memref<1x1x8x4x110xbf16, #tpu.memory_space<vmem>>, vector<1x1x1x4x110xbf16>
    %79 = vector.shape_cast %78 : vector<1x1x1x4x110xbf16> to vector<4x110xbf16>
    %80 = arith.maximumf %77, %79 : vector<4x110xbf16>
    %c0_102 = arith.constant 0 : index
    %c0_103 = arith.constant 0 : index
    %c6_104 = arith.constant 6 : index
    %c0_105 = arith.constant 0 : index
    %c0_106 = arith.constant 0 : index
    %81 = vector.load %arg4[%c0_102, %c0_103, %c6_104, %c0_105, %c0_106] : memref<1x1x8x4x110xbf16, #tpu.memory_space<vmem>>, vector<1x1x1x4x110xbf16>
    %82 = vector.shape_cast %81 : vector<1x1x1x4x110xbf16> to vector<4x110xbf16>
    %83 = arith.maximumf %80, %82 : vector<4x110xbf16>
    %c0_107 = arith.constant 0 : index
    %c0_108 = arith.constant 0 : index
    %c7_109 = arith.constant 7 : index
    %c0_110 = arith.constant 0 : index
    %c0_111 = arith.constant 0 : index
    %84 = vector.load %arg4[%c0_107, %c0_108, %c7_109, %c0_110, %c0_111] : memref<1x1x8x4x110xbf16, #tpu.memory_space<vmem>>, vector<1x1x1x4x110xbf16>
    %85 = vector.shape_cast %84 : vector<1x1x1x4x110xbf16> to vector<4x110xbf16>
    %86 = arith.maximumf %83, %85 : vector<4x110xbf16>
    %87 = vector.extract_strided_slice %86 {offsets = [0, 0], sizes = [4, 80], strides = [1, 1]} : vector<4x110xbf16> to vector<4x80xbf16>
    %88 = vector.extract_strided_slice %86 {offsets = [0, 1], sizes = [4, 80], strides = [1, 1]} : vector<4x110xbf16> to vector<4x80xbf16>
    %89 = vector.extract_strided_slice %86 {offsets = [0, 2], sizes = [4, 80], strides = [1, 1]} : vector<4x110xbf16> to vector<4x80xbf16>
    %90 = vector.extract_strided_slice %86 {offsets = [0, 10], sizes = [4, 80], strides = [1, 1]} : vector<4x110xbf16> to vector<4x80xbf16>
    %91 = vector.extract_strided_slice %86 {offsets = [0, 11], sizes = [4, 80], strides = [1, 1]} : vector<4x110xbf16> to vector<4x80xbf16>
    %92 = vector.extract_strided_slice %86 {offsets = [0, 12], sizes = [4, 80], strides = [1, 1]} : vector<4x110xbf16> to vector<4x80xbf16>
    %93 = vector.extract_strided_slice %86 {offsets = [0, 20], sizes = [4, 80], strides = [1, 1]} : vector<4x110xbf16> to vector<4x80xbf16>
    %94 = vector.extract_strided_slice %86 {offsets = [0, 21], sizes = [4, 80], strides = [1, 1]} : vector<4x110xbf16> to vector<4x80xbf16>
    %95 = vector.extract_strided_slice %86 {offsets = [0, 22], sizes = [4, 80], strides = [1, 1]} : vector<4x110xbf16> to vector<4x80xbf16>
    %c0_112 = arith.constant 0 : index
    %c0_113 = arith.constant 0 : index
    %c0_114 = arith.constant 0 : index
    %c0_115 = arith.constant 0 : index
    %c0_116 = arith.constant 0 : index
    %96 = vector.load %arg5[%c0_112, %c0_113, %c0_114, %c0_115, %c0_116] : memref<1x1x8x4x110xbf16, #tpu.memory_space<vmem>>, vector<1x1x1x4x110xbf16>
    %97 = vector.shape_cast %96 : vector<1x1x1x4x110xbf16> to vector<4x110xbf16>
    %c0_117 = arith.constant 0 : index
    %c0_118 = arith.constant 0 : index
    %c1_119 = arith.constant 1 : index
    %c0_120 = arith.constant 0 : index
    %c0_121 = arith.constant 0 : index
    %98 = vector.load %arg5[%c0_117, %c0_118, %c1_119, %c0_120, %c0_121] : memref<1x1x8x4x110xbf16, #tpu.memory_space<vmem>>, vector<1x1x1x4x110xbf16>
    %99 = vector.shape_cast %98 : vector<1x1x1x4x110xbf16> to vector<4x110xbf16>
    %100 = arith.maximumf %97, %99 : vector<4x110xbf16>
    %c0_122 = arith.constant 0 : index
    %c0_123 = arith.constant 0 : index
    %c2_124 = arith.constant 2 : index
    %c0_125 = arith.constant 0 : index
    %c0_126 = arith.constant 0 : index
    %101 = vector.load %arg5[%c0_122, %c0_123, %c2_124, %c0_125, %c0_126] : memref<1x1x8x4x110xbf16, #tpu.memory_space<vmem>>, vector<1x1x1x4x110xbf16>
    %102 = vector.shape_cast %101 : vector<1x1x1x4x110xbf16> to vector<4x110xbf16>
    %103 = arith.maximumf %100, %102 : vector<4x110xbf16>
    %c0_127 = arith.constant 0 : index
    %c0_128 = arith.constant 0 : index
    %c3_129 = arith.constant 3 : index
    %c0_130 = arith.constant 0 : index
    %c0_131 = arith.constant 0 : index
    %104 = vector.load %arg5[%c0_127, %c0_128, %c3_129, %c0_130, %c0_131] : memref<1x1x8x4x110xbf16, #tpu.memory_space<vmem>>, vector<1x1x1x4x110xbf16>
    %105 = vector.shape_cast %104 : vector<1x1x1x4x110xbf16> to vector<4x110xbf16>
    %106 = arith.maximumf %103, %105 : vector<4x110xbf16>
    %c0_132 = arith.constant 0 : index
    %c0_133 = arith.constant 0 : index
    %c4_134 = arith.constant 4 : index
    %c0_135 = arith.constant 0 : index
    %c0_136 = arith.constant 0 : index
    %107 = vector.load %arg5[%c0_132, %c0_133, %c4_134, %c0_135, %c0_136] : memref<1x1x8x4x110xbf16, #tpu.memory_space<vmem>>, vector<1x1x1x4x110xbf16>
    %108 = vector.shape_cast %107 : vector<1x1x1x4x110xbf16> to vector<4x110xbf16>
    %109 = arith.maximumf %106, %108 : vector<4x110xbf16>
    %c0_137 = arith.constant 0 : index
    %c0_138 = arith.constant 0 : index
    %c5_139 = arith.constant 5 : index
    %c0_140 = arith.constant 0 : index
    %c0_141 = arith.constant 0 : index
    %110 = vector.load %arg5[%c0_137, %c0_138, %c5_139, %c0_140, %c0_141] : memref<1x1x8x4x110xbf16, #tpu.memory_space<vmem>>, vector<1x1x1x4x110xbf16>
    %111 = vector.shape_cast %110 : vector<1x1x1x4x110xbf16> to vector<4x110xbf16>
    %112 = arith.maximumf %109, %111 : vector<4x110xbf16>
    %c0_142 = arith.constant 0 : index
    %c0_143 = arith.constant 0 : index
    %c6_144 = arith.constant 6 : index
    %c0_145 = arith.constant 0 : index
    %c0_146 = arith.constant 0 : index
    %113 = vector.load %arg5[%c0_142, %c0_143, %c6_144, %c0_145, %c0_146] : memref<1x1x8x4x110xbf16, #tpu.memory_space<vmem>>, vector<1x1x1x4x110xbf16>
    %114 = vector.shape_cast %113 : vector<1x1x1x4x110xbf16> to vector<4x110xbf16>
    %115 = arith.maximumf %112, %114 : vector<4x110xbf16>
    %c0_147 = arith.constant 0 : index
    %c0_148 = arith.constant 0 : index
    %c7_149 = arith.constant 7 : index
    %c0_150 = arith.constant 0 : index
    %c0_151 = arith.constant 0 : index
    %116 = vector.load %arg5[%c0_147, %c0_148, %c7_149, %c0_150, %c0_151] : memref<1x1x8x4x110xbf16, #tpu.memory_space<vmem>>, vector<1x1x1x4x110xbf16>
    %117 = vector.shape_cast %116 : vector<1x1x1x4x110xbf16> to vector<4x110xbf16>
    %118 = arith.maximumf %115, %117 : vector<4x110xbf16>
    %119 = vector.extract_strided_slice %118 {offsets = [0, 0], sizes = [4, 80], strides = [1, 1]} : vector<4x110xbf16> to vector<4x80xbf16>
    %120 = vector.extract_strided_slice %118 {offsets = [0, 1], sizes = [4, 80], strides = [1, 1]} : vector<4x110xbf16> to vector<4x80xbf16>
    %121 = vector.extract_strided_slice %118 {offsets = [0, 2], sizes = [4, 80], strides = [1, 1]} : vector<4x110xbf16> to vector<4x80xbf16>
    %122 = vector.extract_strided_slice %118 {offsets = [0, 10], sizes = [4, 80], strides = [1, 1]} : vector<4x110xbf16> to vector<4x80xbf16>
    %123 = vector.extract_strided_slice %118 {offsets = [0, 11], sizes = [4, 80], strides = [1, 1]} : vector<4x110xbf16> to vector<4x80xbf16>
    %124 = vector.extract_strided_slice %118 {offsets = [0, 12], sizes = [4, 80], strides = [1, 1]} : vector<4x110xbf16> to vector<4x80xbf16>
    %125 = vector.extract_strided_slice %118 {offsets = [0, 20], sizes = [4, 80], strides = [1, 1]} : vector<4x110xbf16> to vector<4x80xbf16>
    %126 = vector.extract_strided_slice %118 {offsets = [0, 21], sizes = [4, 80], strides = [1, 1]} : vector<4x110xbf16> to vector<4x80xbf16>
    %127 = vector.extract_strided_slice %118 {offsets = [0, 22], sizes = [4, 80], strides = [1, 1]} : vector<4x110xbf16> to vector<4x80xbf16>
    %c0_152 = arith.constant 0 : index
    %c0_153 = arith.constant 0 : index
    %128 = vector.load %arg6[%c0_152, %c0_153] : memref<8x108xbf16, #tpu.memory_space<vmem>>, vector<8x108xbf16>
    %129 = tpu.concatenate %23, %24, %25, %26, %27, %28, %29, %30, %31, %55, %56, %57, %58, %59, %60, %61 in 0 : vector<4x80xbf16>, vector<4x80xbf16>, vector<4x80xbf16>, vector<4x80xbf16>, vector<4x80xbf16>, vector<4x80xbf16>, vector<4x80xbf16>, vector<4x80xbf16>, vector<4x80xbf16>, vector<4x80xbf16>, vector<4x80xbf16>, vector<4x80xbf16>, vector<4x80xbf16>, vector<4x80xbf16>, vector<4x80xbf16>, vector<4x80xbf16> -> vector<64x80xbf16>
    %130 = tpu.concatenate %62, %63, %87, %88, %89, %90, %91, %92, %93, %94, %95 in 0 : vector<4x80xbf16>, vector<4x80xbf16>, vector<4x80xbf16>, vector<4x80xbf16>, vector<4x80xbf16>, vector<4x80xbf16>, vector<4x80xbf16>, vector<4x80xbf16>, vector<4x80xbf16>, vector<4x80xbf16>, vector<4x80xbf16> -> vector<44x80xbf16>
    %131 = tpu.concatenate %129, %130 in 0 : vector<64x80xbf16>, vector<44x80xbf16> -> vector<108x80xbf16>
    %cst = arith.constant dense<0.000000e+00> : vector<8x80xf32>
    %132 = tpu.matmul %128, %131, %cst {dimension_numbers = #tpu.dot_dimension_numbers<[1], [0], [0], [1], [0, 0, 1, 1], [], []>} : vector<8x108xbf16>, vector<108x80xbf16>, vector<8x80xf32> -> vector<8x80xf32>
    %133 = vector.extract_strided_slice %132 {offsets = [0, 0], sizes = [8, 8], strides = [1, 1]} : vector<8x80xf32> to vector<8x8xf32>
    %134 = vector.extract_strided_slice %132 {offsets = [0, 10], sizes = [8, 8], strides = [1, 1]} : vector<8x80xf32> to vector<8x8xf32>
    %135 = vector.extract_strided_slice %132 {offsets = [0, 20], sizes = [8, 8], strides = [1, 1]} : vector<8x80xf32> to vector<8x8xf32>
    %136 = vector.extract_strided_slice %132 {offsets = [0, 30], sizes = [8, 8], strides = [1, 1]} : vector<8x80xf32> to vector<8x8xf32>
    %137 = vector.extract_strided_slice %132 {offsets = [0, 40], sizes = [8, 8], strides = [1, 1]} : vector<8x80xf32> to vector<8x8xf32>
    %138 = vector.extract_strided_slice %132 {offsets = [0, 50], sizes = [8, 8], strides = [1, 1]} : vector<8x80xf32> to vector<8x8xf32>
    %139 = vector.extract_strided_slice %132 {offsets = [0, 60], sizes = [8, 8], strides = [1, 1]} : vector<8x80xf32> to vector<8x8xf32>
    %140 = vector.extract_strided_slice %132 {offsets = [0, 70], sizes = [8, 8], strides = [1, 1]} : vector<8x80xf32> to vector<8x8xf32>
    %141 = tpu.concatenate %133, %134, %135, %136, %137, %138, %139, %140 in 1 : vector<8x8xf32>, vector<8x8xf32>, vector<8x8xf32>, vector<8x8xf32>, vector<8x8xf32>, vector<8x8xf32>, vector<8x8xf32>, vector<8x8xf32> -> vector<8x64xf32>
    %142 = tpu.concatenate %55, %56, %57, %58, %59, %60, %61, %62, %63, %87, %88, %89, %90, %91, %92, %93 in 0 : vector<4x80xbf16>, vector<4x80xbf16>, vector<4x80xbf16>, vector<4x80xbf16>, vector<4x80xbf16>, vector<4x80xbf16>, vector<4x80xbf16>, vector<4x80xbf16>, vector<4x80xbf16>, vector<4x80xbf16>, vector<4x80xbf16>, vector<4x80xbf16>, vector<4x80xbf16>, vector<4x80xbf16>, vector<4x80xbf16>, vector<4x80xbf16> -> vector<64x80xbf16>
    %143 = tpu.concatenate %94, %95, %119, %120, %121, %122, %123, %124, %125, %126, %127 in 0 : vector<4x80xbf16>, vector<4x80xbf16>, vector<4x80xbf16>, vector<4x80xbf16>, vector<4x80xbf16>, vector<4x80xbf16>, vector<4x80xbf16>, vector<4x80xbf16>, vector<4x80xbf16>, vector<4x80xbf16>, vector<4x80xbf16> -> vector<44x80xbf16>
    %144 = tpu.concatenate %142, %143 in 0 : vector<64x80xbf16>, vector<44x80xbf16> -> vector<108x80xbf16>
    %cst_154 = arith.constant dense<0.000000e+00> : vector<8x80xf32>
    %145 = tpu.matmul %128, %144, %cst_154 {dimension_numbers = #tpu.dot_dimension_numbers<[1], [0], [0], [1], [0, 0, 1, 1], [], []>} : vector<8x108xbf16>, vector<108x80xbf16>, vector<8x80xf32> -> vector<8x80xf32>
    %146 = vector.extract_strided_slice %145 {offsets = [0, 0], sizes = [8, 8], strides = [1, 1]} : vector<8x80xf32> to vector<8x8xf32>
    %147 = vector.extract_strided_slice %145 {offsets = [0, 10], sizes = [8, 8], strides = [1, 1]} : vector<8x80xf32> to vector<8x8xf32>
    %148 = vector.extract_strided_slice %145 {offsets = [0, 20], sizes = [8, 8], strides = [1, 1]} : vector<8x80xf32> to vector<8x8xf32>
    %149 = vector.extract_strided_slice %145 {offsets = [0, 30], sizes = [8, 8], strides = [1, 1]} : vector<8x80xf32> to vector<8x8xf32>
    %150 = vector.extract_strided_slice %145 {offsets = [0, 40], sizes = [8, 8], strides = [1, 1]} : vector<8x80xf32> to vector<8x8xf32>
    %151 = vector.extract_strided_slice %145 {offsets = [0, 50], sizes = [8, 8], strides = [1, 1]} : vector<8x80xf32> to vector<8x8xf32>
    %152 = vector.extract_strided_slice %145 {offsets = [0, 60], sizes = [8, 8], strides = [1, 1]} : vector<8x80xf32> to vector<8x8xf32>
    %153 = vector.extract_strided_slice %145 {offsets = [0, 70], sizes = [8, 8], strides = [1, 1]} : vector<8x80xf32> to vector<8x8xf32>
    %154 = tpu.concatenate %146, %147, %148, %149, %150, %151, %152, %153 in 1 : vector<8x8xf32>, vector<8x8xf32>, vector<8x8xf32>, vector<8x8xf32>, vector<8x8xf32>, vector<8x8xf32>, vector<8x8xf32>, vector<8x8xf32> -> vector<8x64xf32>
    %155 = tpu.concatenate %141, %154 in 1 : vector<8x64xf32>, vector<8x64xf32> -> vector<8x128xf32>
    %cst_155 = arith.constant dense<0.000000e+00> : vector<8xf32>
    %156 = vector.multi_reduction <add>, %155, %cst_155 [1] : vector<8x128xf32> to vector<8xf32>
    %157 = vector.shape_cast %156 : vector<8xf32> to vector<8x1xf32>
    %158 = arith.mulf %155, %155 : vector<8x128xf32>
    %cst_156 = arith.constant dense<0.000000e+00> : vector<8xf32>
    %159 = vector.multi_reduction <add>, %158, %cst_156 [1] : vector<8x128xf32> to vector<8xf32>
    %160 = vector.shape_cast %159 : vector<8xf32> to vector<8x1xf32>
    %161 = tpu.concatenate %157, %160 in 1 : vector<8x1xf32>, vector<8x1xf32> -> vector<8x2xf32>
    %c0_157 = arith.constant 0 : index
    %c0_158 = arith.constant 0 : index
    %c0_159 = arith.constant 0 : index
    %c0_160 = arith.constant 0 : index
    %162 = vector.load %arg8[%c0_157, %c0_158, %c0_159, %c0_160] : memref<1x1x8x2xf32, #tpu.memory_space<vmem>>, vector<1x1x8x2xf32>
    %163 = vector.shape_cast %162 : vector<1x1x8x2xf32> to vector<8x2xf32>
    %164 = vector.shape_cast %161 : vector<8x2xf32> to vector<1x1x8x2xf32>
    tpu.vector_store %arg8[%c0_157, %c0_158, %c0_159, %c0_160], %164 {strides = array<i32>} : memref<1x1x8x2xf32, #tpu.memory_space<vmem>>, vector<1x1x8x2xf32>,
    %165 = arith.truncf %155 : vector<8x128xf32> to vector<8x128xbf16>
    %c0_161 = arith.constant 0 : index
    %c0_162 = arith.constant 0 : index
    %c0_163 = arith.constant 0 : index
    %166 = vector.load %arg7[%c0_161, %c0_162, %c0_163] : memref<1x8x128xbf16, #tpu.memory_space<vmem>>, vector<1x8x128xbf16>
    %167 = vector.shape_cast %166 : vector<1x8x128xbf16> to vector<8x128xbf16>
    %168 = vector.shape_cast %165 : vector<8x128xbf16> to vector<1x8x128xbf16>
    tpu.vector_store %arg7[%c0_161, %c0_162, %c0_163], %168 {strides = array<i32>} : memref<1x8x128xbf16, #tpu.memory_space<vmem>>, vector<1x8x128xbf16>,
    return
  }
  func.func @transform_0(%arg0: i32, %arg1: i32) -> (i32, i32, i32, i32, i32) {
    %c2_i32 = arith.constant 2 : i32
    %0 = arith.muli %c2_i32, %arg1 : i32
    %c0_i32 = arith.constant 0 : i32
    %1 = arith.addi %0, %c0_i32 : i32
    %c0_i32_0 = arith.constant 0 : i32
    %c0_i32_1 = arith.constant 0 : i32
    %c0_i32_2 = arith.constant 0 : i32
    %c0_i32_3 = arith.constant 0 : i32
    return %arg0, %1, %c0_i32_0, %c0_i32_1, %c0_i32_2 : i32, i32, i32, i32, i32
  }
  func.func @transform_1(%arg0: i32, %arg1: i32) -> (i32, i32, i32, i32, i32) {
    %c2_i32 = arith.constant 2 : i32
    %0 = arith.muli %c2_i32, %arg1 : i32
    %c1_i32 = arith.constant 1 : i32
    %1 = arith.addi %0, %c1_i32 : i32
    %c0_i32 = arith.constant 0 : i32
    %c0_i32_0 = arith.constant 0 : i32
    %c0_i32_1 = arith.constant 0 : i32
    %c0_i32_2 = arith.constant 0 : i32
    return %arg0, %1, %c0_i32, %c0_i32_0, %c0_i32_1 : i32, i32, i32, i32, i32
  }
  func.func @transform_2(%arg0: i32, %arg1: i32) -> (i32, i32, i32, i32, i32) {
    %c2_i32 = arith.constant 2 : i32
    %0 = arith.muli %c2_i32, %arg1 : i32
    %c2_i32_0 = arith.constant 2 : i32
    %1 = arith.addi %0, %c2_i32_0 : i32
    %c0_i32 = arith.constant 0 : i32
    %c0_i32_1 = arith.constant 0 : i32
    %c0_i32_2 = arith.constant 0 : i32
    %c0_i32_3 = arith.constant 0 : i32
    return %arg0, %1, %c0_i32, %c0_i32_1, %c0_i32_2 : i32, i32, i32, i32, i32
  }
  func.func @transform_3(%arg0: i32, %arg1: i32) -> (i32, i32, i32, i32, i32) {
    %c2_i32 = arith.constant 2 : i32
    %0 = arith.muli %c2_i32, %arg1 : i32
    %c3_i32 = arith.constant 3 : i32
    %1 = arith.addi %0, %c3_i32 : i32
    %c0_i32 = arith.constant 0 : i32
    %c0_i32_0 = arith.constant 0 : i32
    %c0_i32_1 = arith.constant 0 : i32
    %c0_i32_2 = arith.constant 0 : i32
    return %arg0, %1, %c0_i32, %c0_i32_0, %c0_i32_1 : i32, i32, i32, i32, i32
  }
  func.func @transform_4(%arg0: i32, %arg1: i32) -> (i32, i32) {
    %c0_i32 = arith.constant 0 : i32
    %c0_i32_0 = arith.constant 0 : i32
    %c0_i32_1 = arith.constant 0 : i32
    return %c0_i32, %c0_i32_0 : i32, i32
  }
  func.func @transform_5(%arg0: i32, %arg1: i32) -> (i32, i32, i32) {
    %c0_i32 = arith.constant 0 : i32
    %c0_i32_0 = arith.constant 0 : i32
    return %arg0, %c0_i32, %arg1 : i32, i32, i32
  }
  func.func @transform_6(%arg0: i32, %arg1: i32) -> (i32, i32, i32, i32) {
    %c0_i32 = arith.constant 0 : i32
    %c0_i32_0 = arith.constant 0 : i32
    %c0_i32_1 = arith.constant 0 : i32
    return %arg0, %arg1, %c0_i32, %c0_i32_0 : i32, i32, i32, i32
  }
}

module attributes {stable_mosaic.version = 11 : i64} {
  func.func @_bn_relu_kernel(%arg0: i32, %arg1: i32, %arg2: memref<1x8x512xbf16, #tpu.memory_space<vmem>>, %arg3: memref<8x1xf32, #tpu.memory_space<vmem>>, %arg4: memref<8x1xf32, #tpu.memory_space<vmem>>, %arg5: memref<1x8x512xf32, #tpu.memory_space<vmem>>) attributes {dimension_semantics = [#tpu.dimension_semantics<parallel>, #tpu.dimension_semantics<parallel>], iteration_bounds = array<i64: 2, 1>, scalar_prefetch = 0 : i64, scratch_operands = 0 : i64, tpu.core_type = #tpu.core_type<tc>, window_params = [{transform_indices = @transform_0, window_bounds = array<i64: 1, 8, 512>}, {pipeline_mode = #tpu.pipeline_mode<synchronous>, transform_indices = @transform_1, window_bounds = array<i64: 8, 1>}, {pipeline_mode = #tpu.pipeline_mode<synchronous>, transform_indices = @transform_2, window_bounds = array<i64: 8, 1>}, {transform_indices = @transform_3, window_bounds = array<i64: 1, 8, 512>}]} {
    %c0 = arith.constant 0 : index
    %c0_0 = arith.constant 0 : index
    %c0_1 = arith.constant 0 : index
    %0 = vector.load %arg2[%c0, %c0_0, %c0_1] : memref<1x8x512xbf16, #tpu.memory_space<vmem>>, vector<1x8x512xbf16>
    %1 = vector.shape_cast %0 : vector<1x8x512xbf16> to vector<8x512xbf16>
    %2 = arith.extf %1 : vector<8x512xbf16> to vector<8x512xf32>
    %c0_2 = arith.constant 0 : index
    %c0_3 = arith.constant 0 : index
    %3 = vector.load %arg3[%c0_2, %c0_3] : memref<8x1xf32, #tpu.memory_space<vmem>>, vector<8x1xf32>
    %4 = vector.broadcast %3 : vector<8x1xf32> to vector<8x512xf32>
    %5 = arith.mulf %2, %4 : vector<8x512xf32>
    %c0_4 = arith.constant 0 : index
    %c0_5 = arith.constant 0 : index
    %6 = vector.load %arg4[%c0_4, %c0_5] : memref<8x1xf32, #tpu.memory_space<vmem>>, vector<8x1xf32>
    %7 = vector.broadcast %6 : vector<8x1xf32> to vector<8x512xf32>
    %8 = arith.addf %5, %7 : vector<8x512xf32>
    %cst = arith.constant 0.000000e+00 : f32
    %9 = vector.broadcast %cst : f32 to vector<8x512xf32>
    %10 = arith.maximumf %8, %9 : vector<8x512xf32>
    %c0_6 = arith.constant 0 : index
    %c0_7 = arith.constant 0 : index
    %c0_8 = arith.constant 0 : index
    %11 = vector.load %arg5[%c0_6, %c0_7, %c0_8] : memref<1x8x512xf32, #tpu.memory_space<vmem>>, vector<1x8x512xf32>
    %12 = vector.shape_cast %11 : vector<1x8x512xf32> to vector<8x512xf32>
    %13 = vector.shape_cast %10 : vector<8x512xf32> to vector<1x8x512xf32>
    tpu.vector_store %arg5[%c0_6, %c0_7, %c0_8], %13 {strides = array<i32>} : memref<1x8x512xf32, #tpu.memory_space<vmem>>, vector<1x8x512xf32>,
    return
  }
  func.func @transform_0(%arg0: i32, %arg1: i32) -> (i32, i32, i32) {
    %c0_i32 = arith.constant 0 : i32
    %c0_i32_0 = arith.constant 0 : i32
    return %arg0, %c0_i32, %arg1 : i32, i32, i32
  }
  func.func @transform_1(%arg0: i32, %arg1: i32) -> (i32, i32) {
    %c0_i32 = arith.constant 0 : i32
    %c0_i32_0 = arith.constant 0 : i32
    %c0_i32_1 = arith.constant 0 : i32
    return %c0_i32, %c0_i32_0 : i32, i32
  }
  func.func @transform_2(%arg0: i32, %arg1: i32) -> (i32, i32) {
    %c0_i32 = arith.constant 0 : i32
    %c0_i32_0 = arith.constant 0 : i32
    %c0_i32_1 = arith.constant 0 : i32
    return %c0_i32, %c0_i32_0 : i32, i32
  }
  func.func @transform_3(%arg0: i32, %arg1: i32) -> (i32, i32, i32) {
    %c0_i32 = arith.constant 0 : i32
    %c0_i32_0 = arith.constant 0 : i32
    return %arg0, %c0_i32, %arg1 : i32, i32, i32
  }
}

</mosaic_0001>

<llo_original>
// kernel: down_forward.2
$region0: #{down_forward.2}
  #allocation0 [shape = 'u32[]', space=smem, size = 0x4, offset = 0x4, fixed_abs, tag = 'smem constant byte address 0x4 - core index']
  #allocation1 [shape = 'u32[144,128]{1,0:T(1,128)}', space=vmem, size = 0x12000, scoped, tag = 'internal scratch']
  %s0 = inlined_call_operand.vmem [shape: bf16[2,10,8,4,110], index: 0, kind: input, shape index: {}, may-alias: {0,1,2,3}]
  %s1 = inlined_call_operand.vmem [shape: bf16[2,10,8,4,110], index: 1, kind: input, shape index: {}, may-alias: {0,1,2,3}]
  %s2 = inlined_call_operand.vmem [shape: bf16[2,10,8,4,110], index: 2, kind: input, shape index: {}, may-alias: {0,1,2,3}]
  %s3 = inlined_call_operand.vmem [shape: bf16[2,10,8,4,110], index: 3, kind: input, shape index: {}, may-alias: {0,1,2,3}]
  %s4 = inlined_call_operand.vmem [shape: bf16[8,108], index: 4, kind: input, shape index: {}]
  %s5 = inlined_call_operand.vmem [shape: bf16[2,8,512], index: 5, kind: output, shape index: {0}]
  %s6 = inlined_call_operand.vmem [shape: f32[2,4,8,2], index: 6, kind: output, shape index: {1}]
  %7 = xla_tuple %s5, %s6
  %s8 = sld [smem:[#allocation0]]
  $region61: #{down_forward.2} parent=0
    _
  %s10 = ssub.s32 1, %s8
  %s11 = scalar_select 0, %s10, %s8
  loop: start=0, step=1, limit=10
  $region2: #{down_forward.2} parent=0 // loop_pre_header
    _
  $region3: #{down_forward.2} parent=0 // loop_header
    %s13 = sphi 0, %s17
    %p14 = scmp.ge.s32.totalorder %s13, 10
    %s20 = sphi 0, %s32
    %s21 = sphi 0, %s28
    %s22 = sphi 0, %s20
    %s23 = sphi 0, %s21
    %s24 = sphi 0, %s22
    %s25 = sphi 0, %s23
    %s39 = sphi 0, %s41
    %s42 = sphi 0, %s39
    %s43 = sphi 0, %s42
    %s59 = sphi 0, %s43
    %s71 = sphi 0, %s73
    %s74 = sphi 0, %s71
    %s75 = sphi 0, %s74
    %s91 = sphi 0, %s75
    %s103 = sphi 0, %s105
    %s106 = sphi 0, %s103
    %s107 = sphi 0, %s106
    %s123 = sphi 0, %s107
    %s135 = sphi 0, %s137
    %s138 = sphi 0, %s135
    %s139 = sphi 0, %s138
    %s155 = sphi 0, %s139
    %s159 = sphi 0, %s159
    %s161 = sphi 0, %s159
    %s162 = sphi 0, %s161
    %s176 = sphi 0, %s162
    %s184 = sphi 0, %s186
    %s187 = sphi 0, %s184
    %s188 = sphi 0, %s187
    %s204 = sphi 0, %s188
    %s212 = sphi 0, %s214
    %s215 = sphi 0, %s212
    %s216 = sphi 0, %s215
    %s232 = sphi 0, %s216
  $region4: #{down_forward.2} parent=0 // loop_header_branch
    %16 = sbr.rel (%p14) target = $region8
  $region5: #{down_forward.2} parent=0 // loop_body
    %s18 = ssub.s32 %s13, 1
    %s19 = ssub.s32 %s13, 2
    %s26 = sadd.s32 1, %s21
    %p27 = scmp.ge.s32.totalorder %s26, 4
    %s28 = scalar_select %p27, 0, %s26
    %s29 = sadd.s32 1, %s20
    %s30 = scalar_select %p27, %s29, %s20
    %p31 = scmp.ge.s32.totalorder %s30, 2
    %s32 = scalar_select %p31, 0, %s30
    %s33 = smul.u32 %s21, 2
    %s34 = smul.u32 %s28, 2
    %s35 = ssub.s32 %s20, %s32
    %s36 = ssub.s32 %s33, %s34
    %s37 = sor.u32 %s35, %s36
    %p38 = scmp.eq.s32.totalorder %s37, 0
    %s40 = sadd.s32 %s39, 1
    %s41 = scalar_select %p38, %s39, %s40
    %p44 = pneg %p38
    %p45 = scmp.eq.s32.totalorder %s13, 7
    %p46 = por %p44, %p45
    %p47 = scmp.ne.s32.totalorder %s39, %s42
    %p48 = scmp.eq.s32.totalorder %s13, 0
    %p49 = por %p47, %p48
    %p50 = scmp.ne.s32.totalorder %s39, %s42
    %p51 = scmp.eq.s32.totalorder %s18, 7
    %p52 = por %p50, %p51
    %p53 = scmp.ne.s32.totalorder %s42, %s43
    %p54 = scmp.eq.s32.totalorder %s18, 0
    %p55 = por %p53, %p54
    %p56 = scmp.ne.s32.totalorder %s42, %s43
    %p57 = scmp.eq.s32.totalorder %s19, 7
    %p58 = por %p56, %p57
    %p60 = scmp.ne.s32.totalorder %s43, %s59
    %p61 = scmp.eq.s32.totalorder %s19, 0
    %p62 = por %p60, %p61
    %s63 = smul.u32 %s21, 2
    %s64 = sadd.s32 %s63, 1
    %s65 = smul.u32 %s28, 2
    %s66 = sadd.s32 %s65, 1
    %s67 = ssub.s32 %s20, %s32
    %s68 = ssub.s32 %s64, %s66
    %s69 = sor.u32 %s67, %s68
    %p70 = scmp.eq.s32.totalorder %s69, 0
    %s72 = sadd.s32 %s71, 1
    %s73 = scalar_select %p70, %s71, %s72
    %p76 = pneg %p70
    %p77 = scmp.eq.s32.totalorder %s13, 7
    %p78 = por %p76, %p77
    %p79 = scmp.ne.s32.totalorder %s71, %s74
    %p80 = scmp.eq.s32.totalorder %s13, 0
    %p81 = por %p79, %p80
    %p82 = scmp.ne.s32.totalorder %s71, %s74
    %p83 = scmp.eq.s32.totalorder %s18, 7
    %p84 = por %p82, %p83
    %p85 = scmp.ne.s32.totalorder %s74, %s75
    %p86 = scmp.eq.s32.totalorder %s18, 0
    %p87 = por %p85, %p86
    %p88 = scmp.ne.s32.totalorder %s74, %s75
    %p89 = scmp.eq.s32.totalorder %s19, 7
    %p90 = por %p88, %p89
    %p92 = scmp.ne.s32.totalorder %s75, %s91
    %p93 = scmp.eq.s32.totalorder %s19, 0
    %p94 = por %p92, %p93
    %s95 = smul.u32 %s21, 2
    %s96 = sadd.s32 %s95, 2
    %s97 = smul.u32 %s28, 2
    %s98 = sadd.s32 %s97, 2
    %s99 = ssub.s32 %s20, %s32
    %s100 = ssub.s32 %s96, %s98
    %s101 = sor.u32 %s99, %s100
    %p102 = scmp.eq.s32.totalorder %s101, 0
    %s104 = sadd.s32 %s103, 1
    %s105 = scalar_select %p102, %s103, %s104
    %p108 = pneg %p102
    %p109 = scmp.eq.s32.totalorder %s13, 7
    %p110 = por %p108, %p109
    %p111 = scmp.ne.s32.totalorder %s103, %s106
    %p112 = scmp.eq.s32.totalorder %s13, 0
    %p113 = por %p111, %p112
    %p114 = scmp.ne.s32.totalorder %s103, %s106
    %p115 = scmp.eq.s32.totalorder %s18, 7
    %p116 = por %p114, %p115
    %p117 = scmp.ne.s32.totalorder %s106, %s107
    %p118 = scmp.eq.s32.totalorder %s18, 0
    %p119 = por %p117, %p118
    %p120 = scmp.ne.s32.totalorder %s106, %s107
    %p121 = scmp.eq.s32.totalorder %s19, 7
    %p122 = por %p120, %p121
    %p124 = scmp.ne.s32.totalorder %s107, %s123
    %p125 = scmp.eq.s32.totalorder %s19, 0
    %p126 = por %p124, %p125
    %s127 = smul.u32 %s21, 2
    %s128 = sadd.s32 %s127, 3
    %s129 = smul.u32 %s28, 2
    %s130 = sadd.s32 %s129, 3
    %s131 = ssub.s32 %s20, %s32
    %s132 = ssub.s32 %s128, %s130
    %s133 = sor.u32 %s131, %s132
    %p134 = scmp.eq.s32.totalorder %s133, 0
    %s136 = sadd.s32 %s135, 1
    %s137 = scalar_select %p134, %s135, %s136
    %p140 = pneg %p134
    %p141 = scmp.eq.s32.totalorder %s13, 7
    %p142 = por %p140, %p141
    %p143 = scmp.ne.s32.totalorder %s135, %s138
    %p144 = scmp.eq.s32.totalorder %s13, 0
    %p145 = por %p143, %p144
    %p146 = scmp.ne.s32.totalorder %s135, %s138
    %p147 = scmp.eq.s32.totalorder %s18, 7
    %p148 = por %p146, %p147
    %p149 = scmp.ne.s32.totalorder %s138, %s139
    %p150 = scmp.eq.s32.totalorder %s18, 0
    %p151 = por %p149, %p150
    %p152 = scmp.ne.s32.totalorder %s138, %s139
    %p153 = scmp.eq.s32.totalorder %s19, 7
    %p154 = por %p152, %p153
    %p156 = scmp.ne.s32.totalorder %s139, %s155
    %p157 = scmp.eq.s32.totalorder %s19, 0
    %p158 = por %p156, %p157
    %s160 = sadd.s32 %s159, 1
    %p163 = scmp.eq.s32.totalorder %s13, 7
    %p164 = scmp.ne.s32.totalorder %s159, %s161
    %p165 = scmp.eq.s32.totalorder %s13, 0
    %p166 = por %p164, %p165
    %p167 = scmp.ne.s32.totalorder %s159, %s161
    %p168 = scmp.eq.s32.totalorder %s18, 7
    %p169 = por %p167, %p168
    %p170 = scmp.ne.s32.totalorder %s161, %s162
    %p171 = scmp.eq.s32.totalorder %s18, 0
    %p172 = por %p170, %p171
    %p173 = scmp.ne.s32.totalorder %s161, %s162
    %p174 = scmp.eq.s32.totalorder %s19, 7
    %p175 = por %p173, %p174
    %p177 = scmp.ne.s32.totalorder %s162, %s176
    %p178 = scmp.eq.s32.totalorder %s19, 0
    %p179 = por %p177, %p178
    %s180 = ssub.s32 %s20, %s32
    %s181 = ssub.s32 %s21, %s28
    %s182 = sor.u32 %s180, %s181
    %p183 = scmp.eq.s32.totalorder %s182, 0
    %s185 = sadd.s32 %s184, 1
    %s186 = scalar_select %p183, %s184, %s185
    %p189 = pneg %p183
    %p190 = scmp.eq.s32.totalorder %s13, 7
    %p191 = por %p189, %p190
    %p192 = scmp.ne.s32.totalorder %s184, %s187
    %p193 = scmp.eq.s32.totalorder %s13, 0
    %p194 = por %p192, %p193
    %p195 = scmp.ne.s32.totalorder %s184, %s187
    %p196 = scmp.eq.s32.totalorder %s18, 7
    %p197 = por %p195, %p196
    %p198 = scmp.ne.s32.totalorder %s187, %s188
    %p199 = scmp.eq.s32.totalorder %s18, 0
    %p200 = por %p198, %p199
    %p201 = scmp.ne.s32.totalorder %s187, %s188
    %p202 = scmp.eq.s32.totalorder %s19, 7
    %p203 = por %p201, %p202
    %p205 = scmp.ne.s32.totalorder %s188, %s204
    %p206 = scmp.eq.s32.totalorder %s19, 0
    %p207 = por %p205, %p206
    %s208 = ssub.s32 %s20, %s32
    %s209 = ssub.s32 %s21, %s28
    %s210 = sor.u32 %s208, %s209
    %p211 = scmp.eq.s32.totalorder %s210, 0
    %s213 = sadd.s32 %s212, 1
    %s214 = scalar_select %p211, %s212, %s213
    %p217 = pneg %p211
    %p218 = scmp.eq.s32.totalorder %s13, 7
    %p219 = por %p217, %p218
    %p220 = scmp.ne.s32.totalorder %s212, %s215
    %p221 = scmp.eq.s32.totalorder %s13, 0
    %p222 = por %p220, %p221
    %p223 = scmp.ne.s32.totalorder %s212, %s215
    %p224 = scmp.eq.s32.totalorder %s18, 7
    %p225 = por %p223, %p224
    %p226 = scmp.ne.s32.totalorder %s215, %s216
    %p227 = scmp.eq.s32.totalorder %s18, 0
    %p228 = por %p226, %p227
    %p229 = scmp.ne.s32.totalorder %s215, %s216
    %p230 = scmp.eq.s32.totalorder %s19, 7
    %p231 = por %p229, %p230
    %p233 = scmp.ne.s32.totalorder %s216, %s232
    %p234 = scmp.eq.s32.totalorder %s19, 0
    %p235 = por %p233, %p234
    %p236 = scmp.le.s32.totalorder 1, %s13
    %p237 = scmp.lt.s32.totalorder %s13, 9
    %p238 = pnand %p236, %p237
    %p239 = pneg %p238
    // Predicated region
    $region9: #{down_forward.2} parent=5 // pred_check
      _
    $region10: #{down_forward.2} parent=5 // pred_check_branch
      %241 = sbr.rel (%p238) target = $region12
    $region11: #{down_forward.2} parent=5 // pred_region
      %s242 = ssub.s32 %s13, 1
      // Predicated region
      $region13: #{down_forward.2} parent=11 // pred_check
        %p243 = pneg %p172
      $region14: #{down_forward.2} parent=11 // pred_check_branch
        %245 = sbr.rel (%p243) target = $region16
      $region15: #{down_forward.2} parent=11 // pred_region
        _
      $region16: #{down_forward.2} parent=11 // pred_fallthru
        _
    $region12: #{down_forward.2} parent=5 // pred_fallthru
      _
    %p246 = scmp.lt.s32.totalorder %s13, 8
    // Predicated region
    $region17: #{down_forward.2} parent=5 // pred_check
      %p247 = pneg %p246
    $region18: #{down_forward.2} parent=5 // pred_check_branch
      %249 = sbr.rel (%p247) target = $region20
    $region19: #{down_forward.2} parent=5 // pred_region
      // Predicated region
      $region21: #{down_forward.2} parent=19 // pred_check
        %p250 = pneg %p49
      $region22: #{down_forward.2} parent=19 // pred_check_branch
        %252 = sbr.rel (%p250) target = $region24
      $region23: #{down_forward.2} parent=19 // pred_region
        %s253 = smul.u32 %s21, 2
        %p254 = scmp.lt.s32.totalorder %s20, 1
        %s255 = scalar_select %p254, %s20, 1
        %p256 = scmp.lt.s32.totalorder %s253, 9
        %s257 = scalar_select %p256, %s253, 9
        %s258 = smul.addr %s257, 8
        %s259 = smul.addr %s255, 80
        %s260 = sadd.s32 %s258, %s259
        %s261 = smul.addr %s260, 2
        %s262 = scalar_lea.vmem %s0, %s261
        %s263 = smul.u32 %s21, 2
      $region24: #{down_forward.2} parent=19 // pred_fallthru
        _
      // Predicated region
      $region25: #{down_forward.2} parent=19 // pred_check
        %p264 = pneg %p81
      $region26: #{down_forward.2} parent=19 // pred_check_branch
        %266 = sbr.rel (%p264) target = $region28
      $region27: #{down_forward.2} parent=19 // pred_region
        %s267 = smul.u32 %s21, 2
        %s268 = sadd.s32 %s267, 1
        %p269 = scmp.lt.s32.totalorder %s20, 1
        %s270 = scalar_select %p269, %s20, 1
        %p271 = scmp.lt.s32.totalorder %s268, 9
        %s272 = scalar_select %p271, %s268, 9
        %s273 = smul.addr %s272, 8
        %s274 = smul.addr %s270, 80
        %s275 = sadd.s32 %s273, %s274
        %s276 = smul.addr %s275, 2
        %s277 = scalar_lea.vmem %s1, %s276
        %s278 = smul.u32 %s21, 2
        %s279 = sadd.s32 %s278, 1
      $region28: #{down_forward.2} parent=19 // pred_fallthru
        _
      // Predicated region
      $region29: #{down_forward.2} parent=19 // pred_check
        %p280 = pneg %p113
      $region30: #{down_forward.2} parent=19 // pred_check_branch
        %282 = sbr.rel (%p280) target = $region32
      $region31: #{down_forward.2} parent=19 // pred_region
        %s283 = smul.u32 %s21, 2
        %s284 = sadd.s32 %s283, 2
        %p285 = scmp.lt.s32.totalorder %s20, 1
        %s286 = scalar_select %p285, %s20, 1
        %p287 = scmp.lt.s32.totalorder %s284, 9
        %s288 = scalar_select %p287, %s284, 9
        %s289 = smul.addr %s288, 8
        %s290 = smul.addr %s286, 80
        %s291 = sadd.s32 %s289, %s290
        %s292 = smul.addr %s291, 2
        %s293 = scalar_lea.vmem %s2, %s292
        %s294 = smul.u32 %s21, 2
        %s295 = sadd.s32 %s294, 2
      $region32: #{down_forward.2} parent=19 // pred_fallthru
        _
      // Predicated region
      $region33: #{down_forward.2} parent=19 // pred_check
        %p296 = pneg %p145
      $region34: #{down_forward.2} parent=19 // pred_check_branch
        %298 = sbr.rel (%p296) target = $region36
      $region35: #{down_forward.2} parent=19 // pred_region
        %s299 = smul.u32 %s21, 2
        %s300 = sadd.s32 %s299, 3
        %p301 = scmp.lt.s32.totalorder %s20, 1
        %s302 = scalar_select %p301, %s20, 1
        %p303 = scmp.lt.s32.totalorder %s300, 9
        %s304 = scalar_select %p303, %s300, 9
        %s305 = smul.addr %s304, 8
        %s306 = smul.addr %s302, 80
        %s307 = sadd.s32 %s305, %s306
        %s308 = smul.addr %s307, 2
        %s309 = scalar_lea.vmem %s3, %s308
        %s310 = smul.u32 %s21, 2
        %s311 = sadd.s32 %s310, 3
      $region36: #{down_forward.2} parent=19 // pred_fallthru
        _
    $region20: #{down_forward.2} parent=5 // pred_fallthru
      _
    %p312 = scmp.le.s32.totalorder 1, %s13
    %p313 = scmp.lt.s32.totalorder %s13, 9
    %p314 = pnand %p312, %p313
    %p315 = pneg %p314
    // Predicated region
    $region37: #{down_forward.2} parent=5 // pred_check
      _
    $region38: #{down_forward.2} parent=5 // pred_check_branch
      %317 = sbr.rel (%p314) target = $region40
    $region39: #{down_forward.2} parent=5 // pred_region
      %s318 = ssub.s32 %s13, 1
      %s319 = smul.u32 %s23, 2
      %p320 = scmp.lt.s32.totalorder %s22, 1
      %s321 = scalar_select %p320, %s22, 1
      %p322 = scmp.lt.s32.totalorder %s319, 9
      %s323 = scalar_select %p322, %s319, 9
      %s324 = smul.addr %s323, 8
      %s325 = smul.addr %s321, 80
      %s326 = sadd.s32 %s324, %s325
      %s327 = smul.addr %s326, 2
      %s328 = scalar_lea.vmem %s0, %s327
      %p329 = pneg %p55
      %p330 = pneg %p52
      %s331 = smul.u32 %s23, 2
      %s332 = sadd.s32 %s331, 1
      %p333 = scmp.lt.s32.totalorder %s22, 1
      %s334 = scalar_select %p333, %s22, 1
      %p335 = scmp.lt.s32.totalorder %s332, 9
      %s336 = scalar_select %p335, %s332, 9
      %s337 = smul.addr %s336, 8
      %s338 = smul.addr %s334, 80
      %s339 = sadd.s32 %s337, %s338
      %s340 = smul.addr %s339, 2
      %s341 = scalar_lea.vmem %s1, %s340
      %p342 = pneg %p87
      %p343 = pneg %p84
      %s344 = smul.u32 %s23, 2
      %s345 = sadd.s32 %s344, 2
      %p346 = scmp.lt.s32.totalorder %s22, 1
      %s347 = scalar_select %p346, %s22, 1
      %p348 = scmp.lt.s32.totalorder %s345, 9
      %s349 = scalar_select %p348, %s345, 9
      %s350 = smul.addr %s349, 8
      %s351 = smul.addr %s347, 80
      %s352 = sadd.s32 %s350, %s351
      %s353 = smul.addr %s352, 2
      %s354 = scalar_lea.vmem %s2, %s353
      %p355 = pneg %p119
      %p356 = pneg %p116
      %s357 = smul.u32 %s23, 2
      %s358 = sadd.s32 %s357, 3
      %p359 = scmp.lt.s32.totalorder %s22, 1
      %s360 = scalar_select %p359, %s22, 1
      %p361 = scmp.lt.s32.totalorder %s358, 9
      %s362 = scalar_select %p361, %s358, 9
      %s363 = smul.addr %s362, 8
      %s364 = smul.addr %s360, 80
      %s365 = sadd.s32 %s363, %s364
      %s366 = smul.addr %s365, 2
      %s367 = scalar_lea.vmem %s3, %s366
      %p368 = pneg %p151
      %p369 = pneg %p148
      %p370 = pneg %p172
      %p371 = pneg %p169
      %p372 = pneg %p200
      %p373 = pneg %p197
      %p374 = scmp.lt.s32.totalorder %s22, 1
      %s375 = scalar_select %p374, %s22, 1
      %p376 = scmp.lt.s32.totalorder %s23, 3
      %s377 = scalar_select %p376, %s23, 3
      %s378 = smul.addr %s375, 4
      %s379 = sadd.s32 %s377, %s378
      %s380 = smul.addr %s379, 4
      %s381 = scalar_lea.vmem %s5, %s380
      %p382 = pneg %p228
      %p383 = pneg %p225
      %p384 = scmp.lt.s32.totalorder %s22, 1
      %s385 = scalar_select %p384, %s22, 1
      %p386 = scmp.lt.s32.totalorder %s23, 3
      %s387 = scalar_select %p386, %s23, 3
      %s388 = smul.addr %s385, 4
      %s389 = sadd.s32 %s387, %s388
      %s390 = smul.addr %s389, 8
      %s391 = scalar_lea.vmem %s6, %s390
      %s392 = smul.u32 %s23, 2
      %p393 = scmp.lt.s32.totalorder %s22, 1
      %s394 = scalar_select %p393, %s22, 1
      %p395 = scmp.lt.s32.totalorder %s392, 9
      %s396 = scalar_select %p395, %s392, 9
      %s397 = smul.addr %s396, 8
      %s398 = smul.addr %s394, 80
      %s399 = sadd.s32 %s397, %s398
      %s400 = smul.addr %s399, 2
      %s401 = scalar_lea.vmem %s0, %s400
      %s402 = smul.u32 %s23, 2
      %s403 = smul.u32 %s23, 2
      %s404 = sadd.s32 %s403, 1
      %p405 = scmp.lt.s32.totalorder %s22, 1
      %s406 = scalar_select %p405, %s22, 1
      %p407 = scmp.lt.s32.totalorder %s404, 9
      %s408 = scalar_select %p407, %s404, 9
      %s409 = smul.addr %s408, 8
      %s410 = smul.addr %s406, 80
      %s411 = sadd.s32 %s409, %s410
      %s412 = smul.addr %s411, 2
      %s413 = scalar_lea.vmem %s1, %s412
      %s414 = smul.u32 %s23, 2
      %s415 = sadd.s32 %s414, 1
      %s416 = smul.u32 %s23, 2
      %s417 = sadd.s32 %s416, 2
      %p418 = scmp.lt.s32.totalorder %s22, 1
      %s419 = scalar_select %p418, %s22, 1
      %p420 = scmp.lt.s32.totalorder %s417, 9
      %s421 = scalar_select %p420, %s417, 9
      %s422 = smul.addr %s421, 8
      %s423 = smul.addr %s419, 80
      %s424 = sadd.s32 %s422, %s423
      %s425 = smul.addr %s424, 2
      %s426 = scalar_lea.vmem %s2, %s425
      %s427 = smul.u32 %s23, 2
      %s428 = sadd.s32 %s427, 2
      %s429 = smul.u32 %s23, 2
      %s430 = sadd.s32 %s429, 3
      %p431 = scmp.lt.s32.totalorder %s22, 1
      %s432 = scalar_select %p431, %s22, 1
      %p433 = scmp.lt.s32.totalorder %s430, 9
      %s434 = scalar_select %p433, %s430, 9
      %s435 = smul.addr %s434, 8
      %s436 = smul.addr %s432, 80
      %s437 = sadd.s32 %s435, %s436
      %s438 = smul.addr %s437, 2
      %s439 = scalar_lea.vmem %s3, %s438
      %s440 = smul.u32 %s23, 2
      %s441 = sadd.s32 %s440, 3
      %p442 = scmp.lt.s32.totalorder %s22, 1
      %s443 = scalar_select %p442, %s22, 1
      %p444 = scmp.lt.s32.totalorder %s23, 3
      %s445 = scalar_select %p444, %s23, 3
      %s446 = smul.addr %s443, 4
      %s447 = sadd.s32 %s445, %s446
      %s448 = smul.addr %s447, 4
      %s449 = scalar_lea.vmem %s5, %s448
      %p450 = scmp.lt.s32.totalorder %s22, 1
      %s451 = scalar_select %p450, %s22, 1
      %p452 = scmp.lt.s32.totalorder %s23, 3
      %s453 = scalar_select %p452, %s23, 3
      %s454 = smul.addr %s451, 4
      %s455 = sadd.s32 %s453, %s454
      %s456 = smul.addr %s455, 8
      %s457 = scalar_lea.vmem %s6, %s456
      %v459 = vld [vmem:[%s401] sm:$0x3]
      %s460 = scalar_lea.vmem %s401, 2
      %v461 = vld [vmem:[%s460] sm:$0x3]
      %v462 = vmax.bf16 %v459, %v461
      %s463 = scalar_lea.vmem %s401, 4
      %v464 = vld [vmem:[%s463] sm:$0x3]
      %v465 = vmax.bf16 %v462, %v464
      %s466 = scalar_lea.vmem %s401, 6
      %v467 = vld [vmem:[%s466] sm:$0x3]
      %v468 = vmax.bf16 %v465, %v467
      %s469 = scalar_lea.vmem %s401, 8
      %v470 = vld [vmem:[%s469] sm:$0x3]
      %v471 = vmax.bf16 %v468, %v470
      %s472 = scalar_lea.vmem %s401, 10
      %v473 = vld [vmem:[%s472] sm:$0x3]
      %v474 = vmax.bf16 %v471, %v473
      %s475 = scalar_lea.vmem %s401, 12
      %v476 = vld [vmem:[%s475] sm:$0x3]
      %v477 = vmax.bf16 %v474, %v476
      %s478 = scalar_lea.vmem %s401, 14
      %v479 = vld [vmem:[%s478] sm:$0x3]
      %v480 = vmax.bf16 %v477, %v479
      %v481 = vld [vmem:[%s413] sm:$0x3]
      %s482 = scalar_lea.vmem %s413, 2
      %v483 = vld [vmem:[%s482] sm:$0x3]
      %v484 = vmax.bf16 %v481, %v483
      %s485 = scalar_lea.vmem %s413, 4
      %v486 = vld [vmem:[%s485] sm:$0x3]
      %v487 = vmax.bf16 %v484, %v486
      %s488 = scalar_lea.vmem %s413, 6
      %v489 = vld [vmem:[%s488] sm:$0x3]
      %v490 = vmax.bf16 %v487, %v489
      %s491 = scalar_lea.vmem %s413, 8
      %v492 = vld [vmem:[%s491] sm:$0x3]
      %v493 = vmax.bf16 %v490, %v492
      %s494 = scalar_lea.vmem %s413, 10
      %v495 = vld [vmem:[%s494] sm:$0x3]
      %v496 = vmax.bf16 %v493, %v495
      %s497 = scalar_lea.vmem %s413, 12
      %v498 = vld [vmem:[%s497] sm:$0x3]
      %v499 = vmax.bf16 %v496, %v498
      %s500 = scalar_lea.vmem %s413, 14
      %v501 = vld [vmem:[%s500] sm:$0x3]
      %v502 = vmax.bf16 %v499, %v501
      %v503 = vld [vmem:[%s426] sm:$0x3]
      %s504 = scalar_lea.vmem %s426, 2
      %v505 = vld [vmem:[%s504] sm:$0x3]
      %v506 = vmax.bf16 %v503, %v505
      %s507 = scalar_lea.vmem %s426, 4
      %v508 = vld [vmem:[%s507] sm:$0x3]
      %v509 = vmax.bf16 %v506, %v508
      %s510 = scalar_lea.vmem %s426, 6
      %v511 = vld [vmem:[%s510] sm:$0x3]
      %v512 = vmax.bf16 %v509, %v511
      %s513 = scalar_lea.vmem %s426, 8
      %v514 = vld [vmem:[%s513] sm:$0x3]
      %v515 = vmax.bf16 %v512, %v514
      %s516 = scalar_lea.vmem %s426, 10
      %v517 = vld [vmem:[%s516] sm:$0x3]
      %v518 = vmax.bf16 %v515, %v517
      %s519 = scalar_lea.vmem %s426, 12
      %v520 = vld [vmem:[%s519] sm:$0x3]
      %v521 = vmax.bf16 %v518, %v520
      %s522 = scalar_lea.vmem %s426, 14
      %v523 = vld [vmem:[%s522] sm:$0x3]
      %v524 = vmax.bf16 %v521, %v523
      %v525 = vld [vmem:[%s439] sm:$0x3]
      %s526 = scalar_lea.vmem %s439, 2
      %v527 = vld [vmem:[%s526] sm:$0x3]
      %v528 = vmax.bf16 %v525, %v527
      %s529 = scalar_lea.vmem %s439, 4
      %v530 = vld [vmem:[%s529] sm:$0x3]
      %v531 = vmax.bf16 %v528, %v530
      %s532 = scalar_lea.vmem %s439, 6
      %v533 = vld [vmem:[%s532] sm:$0x3]
      %v534 = vmax.bf16 %v531, %v533
      %s535 = scalar_lea.vmem %s439, 8
      %v536 = vld [vmem:[%s535] sm:$0x3]
      %v537 = vmax.bf16 %v534, %v536
      %s538 = scalar_lea.vmem %s439, 10
      %v539 = vld [vmem:[%s538] sm:$0x3]
      %v540 = vmax.bf16 %v537, %v539
      %s541 = scalar_lea.vmem %s439, 12
      %v542 = vld [vmem:[%s541] sm:$0x3]
      %v543 = vmax.bf16 %v540, %v542
      %s544 = scalar_lea.vmem %s439, 14
      %v545 = vld [vmem:[%s544] sm:$0x3]
      %v546 = vmax.bf16 %v543, %v545
      %v547 = vld [vmem:[%s4] sm:$0xf]
      %v549 = vcombine.low %v480, %v480
      %v551 = vunpack.c.l.s4 1983009808
      %v552 = vunpack.c.0.s8 %v551
      %v553 = vlaneseq
      %v554 = vshrl.u32 %v553, 7
      %v555 = vsub.s32 %v552, %v554
      %v556 = vrot.slane %v549, %v555
      %v558 = vunpack.c.l.s4 1983009808
      %v559 = vunpack.c.0.s8 %v558
      %v560 = vlaneseq
      %v561 = vshrl.u32 %v560, 7
      %v562 = vsub.s32 %v559, %v561
      %v563 = vrot.slane %v480, %v562
      %564 = vrot.lane.b32.xlu0 %v556, 127
      %v565 = vpop.permute.xlu0 %564
      %v566 = vcombine.low %v563, %v563
      %567 = vrot.lane.b32.xlu0 %v566, 126
      %v568 = vpop.permute.xlu0 %567
      %v569 = vcombine.low %v556, %v556
      %570 = vrot.lane.b32.xlu0 %v569, 118
      %v571 = vpop.permute.xlu0 %570
      %572 = vrot.lane.b32.xlu0 %v563, 117
      %v573 = vpop.permute.xlu0 %572
      %574 = vrot.lane.b32.xlu0 %v556, 116
      %v575 = vpop.permute.xlu0 %574
      %576 = vrot.lane.b32.xlu0 %v566, 108
      %v577 = vpop.permute.xlu0 %576
      %578 = vrot.lane.b32.xlu0 %v569, 107
      %v579 = vpop.permute.xlu0 %578
      %580 = vrot.lane.b32.xlu0 %v563, 106
      %v581 = vpop.permute.xlu0 %580
      %v583 = vcombine.low %v502, %v502
      %v585 = vunpack.c.l.s4 1983009808
      %v586 = vunpack.c.0.s8 %v585
      %v587 = vlaneseq
      %v588 = vshrl.u32 %v587, 7
      %v589 = vsub.s32 %v586, %v588
      %v590 = vrot.slane %v583, %v589
      %v592 = vunpack.c.l.s4 1983009808
      %v593 = vunpack.c.0.s8 %v592
      %v594 = vlaneseq
      %v595 = vshrl.u32 %v594, 7
      %v596 = vsub.s32 %v593, %v595
      %v597 = vrot.slane %v502, %v596
      %v598 = vcombine.low %v597, %v597
      %599 = vrot.lane.b32.xlu0 %v598, 127
      %v600 = vpop.permute.xlu0 %599
      %v601 = vcombine.low %v590, %v590
      %602 = vrot.lane.b32.xlu0 %v601, 126
      %v603 = vpop.permute.xlu0 %602
      %604 = vrot.lane.b32.xlu0 %v597, 118
      %v605 = vpop.permute.xlu0 %604
      %606 = vrot.lane.b32.xlu0 %v590, 117
      %v607 = vpop.permute.xlu0 %606
      %608 = vrot.lane.b32.xlu0 %v598, 116
      %v609 = vpop.permute.xlu0 %608
      %610 = vrot.lane.b32.xlu0 %v601, 108
      %v611 = vpop.permute.xlu0 %610
      %vm612 = vcmask 1041408
      %v615 = vsel %vm612, %v480, %v565
      %vm616 = vcmask 1043456
      %v618 = vsel %vm616, %v615, %v568
      %vm619 = vcmask 1045504
      %v621 = vsel %vm619, %v618, %v571
      %v625 = vsel %vm612, %v573, %v575
      %v627 = vsel %vm616, %v625, %v577
      %v629 = vsel %vm619, %v627, %v579
      %v633 = vsel %vm612, %v581, %v590
      %v635 = vsel %vm616, %v633, %v600
      %v637 = vsel %vm619, %v635, %v603
      %v641 = vsel %vm612, %v605, %v607
      %v643 = vsel %vm616, %v641, %v609
      %v645 = vsel %vm619, %v643, %v611
      %647 = vrot.lane.b32.xlu0 %v590, 127
      %v648 = vpop.permute.xlu0 %647
      %v651 = vunpack.c.l.s4 1983009808
      %v652 = vunpack.c.0.s8 %v651
      %v653 = vlaneseq
      %v654 = vshrl.u32 %v653, 7
      %v655 = vsub.s32 %v652, %v654
      %v656 = vrot.slane %v524, %v655
      %v657 = vcombine.low %v656, %v656
      %658 = vrot.lane.b32.xlu0 %v657, 21
      %v659 = vpop.permute.xlu0 %658
      %v660 = vcombine.low %v524, %v524
      %v662 = vunpack.c.l.s4 1983009808
      %v663 = vunpack.c.0.s8 %v662
      %v664 = vlaneseq
      %v665 = vshrl.u32 %v664, 7
      %v666 = vsub.s32 %v663, %v665
      %v667 = vrot.slane %v660, %v666
      %v668 = vcombine.low %v667, %v667
      %669 = vrot.lane.b32.xlu0 %v668, 20
      %v670 = vpop.permute.xlu0 %669
      %671 = vrot.lane.b32.xlu0 %v656, 19
      %v672 = vpop.permute.xlu0 %671
      %673 = vrot.lane.b32.xlu0 %v667, 11
      %v674 = vpop.permute.xlu0 %673
      %675 = vrot.lane.b32.xlu0 %v657, 10
      %v676 = vpop.permute.xlu0 %675
      %677 = vrot.lane.b32.xlu0 %v668, 9
      %v678 = vpop.permute.xlu0 %677
      %679 = vrot.lane.b32.xlu0 %v656, 1
      %v680 = vpop.permute.xlu0 %679
      %681 = vrot.lane.b32.xlu0 %v657, 127
      %v682 = vpop.permute.xlu0 %681
      %v685 = vsel %vm612, %v502, %v648
      %v687 = vsel %vm616, %v685, %v659
      %v689 = vsel %vm619, %v687, %v670
      %v692 = vsel %vm612, %v672, %v674
      %v694 = vsel %vm616, %v692, %v676
      %v696 = vsel %vm619, %v694, %v678
      %v699 = vsel %vm612, %v680, %v667
      %v701 = vsel %vm616, %v699, %v682
      %705 = vrot.lane.b32.xlu0 %v689, 107
      %v706 = vpop.permute.xlu0 %705
      %707 = vrot.lane.b32.xlu0 %v696, 107
      %v708 = vpop.permute.xlu0 %707
      %709 = vrot.lane.b32.xlu0 %v701, 107
      %v710 = vpop.permute.xlu0 %709
      %vm713 = vcmask 883712
      %v715 = vsel %vm713, %v547, 0
      %v718 = vsel %vm619, %v710, 0
      %720 = vmatprep.subr.bf16.mxu0 0
      %721 = vmatpush1.bf16.msra.mxu0 0
      %722 = vmatprep.subr.bf16.mxu0 0
      %723 = vmatpush1.bf16.msra.mxu0 %v718
      %724 = vmatprep.subr.bf16.mxu0 0
      %725 = vmatpush1.bf16.msra.mxu0 %v708
      %726 = vmatprep.subr.bf16.mxu0 0
      %727 = vmatpush1.bf16.msra.mxu0 %v706
      %728 = vmatprep.subr.bf16.mxu0 0
      %729 = vmatpush1.bf16.msra.mxu0 %v645
      %730 = vmatprep.subr.bf16.mxu0 0
      %731 = vmatpush1.bf16.msra.mxu0 %v637
      %732 = vmatprep.subr.bf16.mxu0 0
      %733 = vmatpush1.bf16.msra.mxu0 %v629
      %734 = vmatprep.subr.bf16.mxu0 0
      %735 = vmatpush1.bf16.msra.mxu0 %v621
      %736 = vmatprep.subr.bf16.mxu0 0
      %737 = vmatpush2.bf16.msra.mxu0 0
      %738 = vmatprep.subr.bf16.mxu0 0
      %739 = vmatpush2.bf16.msra.mxu0 0
      %740 = vmatprep.subr.bf16.mxu0 0
      %741 = vmatpush2.bf16.msra.mxu0 0
      %742 = vmatprep.subr.bf16.mxu0 0
      %743 = vmatpush2.bf16.msra.mxu0 0
      %744 = vmatprep.subr.bf16.mxu0 0
      %745 = vmatpush2.bf16.msra.mxu0 0
      %746 = vmatprep.subr.bf16.mxu0 0
      %747 = vmatpush2.bf16.msra.mxu0 0
      %748 = vmatprep.subr.bf16.mxu0 0
      %749 = vmatpush2.bf16.msra.mxu0 0
      %750 = vmatprep.subr.bf16.mxu0 0
      %751 = vmatpush2.bf16.msra.mxu0 0
      %752 = vmatprep.mubr.bf16.mxu0 0
      %753 = vmatmul.mubr.bf16.gmra.mxu0 %v715
      %v754 = vpop.f32.mrf.mxu0
      %v755 = vadd.f32 0.0, %v754
      %v756 = vpop.f32.mrf.mxu0
      %v757 = vpop.f32.mrf.mxu0
      %v758 = vpop.f32.mrf.mxu0
      %759 = vdwg.mxu0
      %761 = vrot.lane.b32.xlu0 %v755, 126
      %v762 = vpop.permute.xlu0 %761
      %764 = vrot.lane.b32.xlu0 %v755, 124
      %v765 = vpop.permute.xlu0 %764
      %767 = vrot.lane.b32.xlu0 %v755, 122
      %v768 = vpop.permute.xlu0 %767
      %770 = vrot.lane.b32.xlu0 %v755, 120
      %v771 = vpop.permute.xlu0 %770
      %773 = vrot.lane.b32.xlu0 %v755, 118
      %v774 = vpop.permute.xlu0 %773
      %776 = vrot.lane.b32.xlu0 %v755, 116
      %v777 = vpop.permute.xlu0 %776
      %779 = vrot.lane.b32.xlu0 %v755, 114
      %v780 = vpop.permute.xlu0 %779
      %vm782 = vcmask 64512
      %v783 = vsel %vm782, %v755, %v762
      %vm784 = vcmask 130048
      %v785 = vsel %vm784, %v783, %v765
      %vm786 = vcmask 195584
      %v787 = vsel %vm786, %v785, %v768
      %vm788 = vcmask 261120
      %v789 = vsel %vm788, %v787, %v771
      %vm790 = vcmask 326656
      %v791 = vsel %vm790, %v789, %v774
      %vm792 = vcmask 392192
      %v793 = vsel %vm792, %v791, %v777
      %vm794 = vcmask 457728
      %v795 = vsel %vm794, %v793, %v780
      %796 = vrot.lane.b32.xlu0 %v598, 126
      %v797 = vpop.permute.xlu0 %796
      %798 = vrot.lane.b32.xlu0 %v601, 118
      %v799 = vpop.permute.xlu0 %798
      %800 = vrot.lane.b32.xlu0 %v597, 117
      %v801 = vpop.permute.xlu0 %800
      %802 = vrot.lane.b32.xlu0 %v590, 116
      %v803 = vpop.permute.xlu0 %802
      %804 = vrot.lane.b32.xlu0 %v598, 108
      %v805 = vpop.permute.xlu0 %804
      %806 = vrot.lane.b32.xlu0 %v601, 107
      %v807 = vpop.permute.xlu0 %806
      %808 = vrot.lane.b32.xlu0 %v597, 106
      %v809 = vpop.permute.xlu0 %808
      %810 = vrot.lane.b32.xlu0 %v668, 126
      %v811 = vpop.permute.xlu0 %810
      %812 = vrot.lane.b32.xlu0 %v656, 118
      %v813 = vpop.permute.xlu0 %812
      %814 = vrot.lane.b32.xlu0 %v667, 117
      %v815 = vpop.permute.xlu0 %814
      %816 = vrot.lane.b32.xlu0 %v657, 116
      %v817 = vpop.permute.xlu0 %816
      %818 = vrot.lane.b32.xlu0 %v668, 108
      %v819 = vpop.permute.xlu0 %818
      %v821 = vsel %vm616, %v685, %v797
      %v823 = vsel %vm619, %v821, %v799
      %v827 = vsel %vm612, %v801, %v803
      %v829 = vsel %vm616, %v827, %v805
      %v831 = vsel %vm619, %v829, %v807
      %v834 = vsel %vm612, %v809, %v667
      %v835 = vsel %vm616, %v834, %v682
      %v837 = vsel %vm619, %v835, %v811
      %v841 = vsel %vm612, %v813, %v815
      %v843 = vsel %vm616, %v841, %v817
      %v845 = vsel %vm619, %v843, %v819
      %847 = vrot.lane.b32.xlu0 %v667, 127
      %v848 = vpop.permute.xlu0 %847
      %v851 = vunpack.c.l.s4 1983009808
      %v852 = vunpack.c.0.s8 %v851
      %v853 = vlaneseq
      %v854 = vshrl.u32 %v853, 7
      %v855 = vsub.s32 %v852, %v854
      %v856 = vrot.slane %v546, %v855
      %v857 = vcombine.low %v856, %v856
      %858 = vrot.lane.b32.xlu0 %v857, 21
      %v859 = vpop.permute.xlu0 %858
      %v860 = vcombine.low %v546, %v546
      %v862 = vunpack.c.l.s4 1983009808
      %v863 = vunpack.c.0.s8 %v862
      %v864 = vlaneseq
      %v865 = vshrl.u32 %v864, 7
      %v866 = vsub.s32 %v863, %v865
      %v867 = vrot.slane %v860, %v866
      %v868 = vcombine.low %v867, %v867
      %869 = vrot.lane.b32.xlu0 %v868, 20
      %v870 = vpop.permute.xlu0 %869
      %871 = vrot.lane.b32.xlu0 %v856, 19
      %v872 = vpop.permute.xlu0 %871
      %873 = vrot.lane.b32.xlu0 %v867, 11
      %v874 = vpop.permute.xlu0 %873
      %875 = vrot.lane.b32.xlu0 %v857, 10
      %v876 = vpop.permute.xlu0 %875
      %877 = vrot.lane.b32.xlu0 %v868, 9
      %v878 = vpop.permute.xlu0 %877
      %879 = vrot.lane.b32.xlu0 %v856, 1
      %v880 = vpop.permute.xlu0 %879
      %881 = vrot.lane.b32.xlu0 %v857, 127
      %v882 = vpop.permute.xlu0 %881
      %v885 = vsel %vm612, %v524, %v848
      %v887 = vsel %vm616, %v885, %v859
      %v889 = vsel %vm619, %v887, %v870
      %v892 = vsel %vm612, %v872, %v874
      %v894 = vsel %vm616, %v892, %v876
      %v896 = vsel %vm619, %v894, %v878
      %v899 = vsel %vm612, %v880, %v867
      %v901 = vsel %vm616, %v899, %v882
      %905 = vrot.lane.b32.xlu0 %v889, 107
      %v906 = vpop.permute.xlu0 %905
      %907 = vrot.lane.b32.xlu0 %v896, 107
      %v908 = vpop.permute.xlu0 %907
      %909 = vrot.lane.b32.xlu0 %v901, 107
      %v910 = vpop.permute.xlu0 %909
      %v914 = vsel %vm619, %v910, 0
      %916 = vmatprep.subr.bf16.mxu0 0
      %917 = vmatpush1.bf16.msra.mxu0 0
      %918 = vmatprep.subr.bf16.mxu0 0
      %919 = vmatpush1.bf16.msra.mxu0 %v914
      %920 = vmatprep.subr.bf16.mxu0 0
      %921 = vmatpush1.bf16.msra.mxu0 %v908
      %922 = vmatprep.subr.bf16.mxu0 0
      %923 = vmatpush1.bf16.msra.mxu0 %v906
      %924 = vmatprep.subr.bf16.mxu0 0
      %925 = vmatpush1.bf16.msra.mxu0 %v845
      %926 = vmatprep.subr.bf16.mxu0 0
      %927 = vmatpush1.bf16.msra.mxu0 %v837
      %928 = vmatprep.subr.bf16.mxu0 0
      %929 = vmatpush1.bf16.msra.mxu0 %v831
      %930 = vmatprep.subr.bf16.mxu0 0
      %931 = vmatpush1.bf16.msra.mxu0 %v823
      %932 = vmatprep.subr.bf16.mxu0 0
      %933 = vmatpush2.bf16.msra.mxu0 0
      %934 = vmatprep.subr.bf16.mxu0 0
      %935 = vmatpush2.bf16.msra.mxu0 0
      %936 = vmatprep.subr.bf16.mxu0 0
      %937 = vmatpush2.bf16.msra.mxu0 0
      %938 = vmatprep.subr.bf16.mxu0 0
      %939 = vmatpush2.bf16.msra.mxu0 0
      %940 = vmatprep.subr.bf16.mxu0 0
      %941 = vmatpush2.bf16.msra.mxu0 0
      %942 = vmatprep.subr.bf16.mxu0 0
      %943 = vmatpush2.bf16.msra.mxu0 0
      %944 = vmatprep.subr.bf16.mxu0 0
      %945 = vmatpush2.bf16.msra.mxu0 0
      %946 = vmatprep.subr.bf16.mxu0 0
      %947 = vmatpush2.bf16.msra.mxu0 0
      %948 = vmatprep.mubr.bf16.mxu0 0
      %949 = vmatmul.mubr.bf16.gmra.mxu0 %v715
      %v950 = vpop.f32.mrf.mxu0
      %v951 = vadd.f32 0.0, %v950
      %v952 = vpop.f32.mrf.mxu0
      %v953 = vpop.f32.mrf.mxu0
      %v954 = vpop.f32.mrf.mxu0
      %955 = vdwg.mxu0
      %957 = vrot.lane.b32.xlu0 %v951, 126
      %v958 = vpop.permute.xlu0 %957
      %960 = vrot.lane.b32.xlu0 %v951, 124
      %v961 = vpop.permute.xlu0 %960
      %963 = vrot.lane.b32.xlu0 %v951, 122
      %v964 = vpop.permute.xlu0 %963
      %966 = vrot.lane.b32.xlu0 %v951, 120
      %v967 = vpop.permute.xlu0 %966
      %969 = vrot.lane.b32.xlu0 %v951, 118
      %v970 = vpop.permute.xlu0 %969
      %972 = vrot.lane.b32.xlu0 %v951, 116
      %v973 = vpop.permute.xlu0 %972
      %975 = vrot.lane.b32.xlu0 %v951, 114
      %v976 = vpop.permute.xlu0 %975
      %v978 = vsel %vm782, %v951, %v958
      %v979 = vsel %vm784, %v978, %v961
      %v980 = vsel %vm786, %v979, %v964
      %v981 = vsel %vm788, %v980, %v967
      %v982 = vsel %vm790, %v981, %v970
      %v983 = vsel %vm792, %v982, %v973
      %v984 = vsel %vm794, %v983, %v976
      %986 = vrot.lane.b32.xlu0 %v984, 64
      %v987 = vpop.permute.xlu0 %986
      %vm989 = vcmask 523264
      %v990 = vsel %vm989, %v795, %v987
      %991 = vadd.xlane.f32.xlu0 %v990
      %v992 = vpop.xlane.xlu0 %991
      %v993 = vmul.f32 %v990, %v990
      %994 = vadd.xlane.f32.xlu0 %v993
      %v995 = vpop.xlane.xlu0 %994
      %vm996 = vcmask 7168
      %v997 = vsel %vm996, %v992, %v995
      %vm998 = vcmask 15360
      %999 = vst.msk [vmem:[%s457] sm:$0xff] %vm998, %v997
      %v1000 = vpack.c.bf16 %v990, %v990
      %1001 = vst [vmem:[%s449] sm:$0xf] %v1000
      %p1002 = scmp.lt.s32.totalorder %s22, 1
      %s1003 = scalar_select %p1002, %s22, 1
      %p1004 = scmp.lt.s32.totalorder %s23, 3
      %s1005 = scalar_select %p1004, %s23, 3
      %s1006 = smul.addr %s1003, 4
      %s1007 = sadd.s32 %s1005, %s1006
      %s1008 = smul.addr %s1007, 4
      %s1009 = scalar_lea.vmem %s5, %s1008
      %p1010 = scmp.lt.s32.totalorder %s22, 1
      %s1011 = scalar_select %p1010, %s22, 1
      %p1012 = scmp.lt.s32.totalorder %s23, 3
      %s1013 = scalar_select %p1012, %s23, 3
      %s1014 = smul.addr %s1011, 4
      %s1015 = sadd.s32 %s1013, %s1014
      %s1016 = smul.addr %s1015, 8
      %s1017 = scalar_lea.vmem %s6, %s1016
      // Predicated region
      $region41: #{down_forward.2} parent=39 // pred_check
        %p1018 = pneg %p197
      $region42: #{down_forward.2} parent=39 // pred_check_branch
        %1020 = sbr.rel (%p1018) target = $region44
      $region43: #{down_forward.2} parent=39 // pred_region
        _
      $region44: #{down_forward.2} parent=39 // pred_fallthru
        _
      // Predicated region
      $region45: #{down_forward.2} parent=39 // pred_check
        %p1021 = pneg %p225
      $region46: #{down_forward.2} parent=39 // pred_check_branch
        %1023 = sbr.rel (%p1021) target = $region48
      $region47: #{down_forward.2} parent=39 // pred_region
        _
      $region48: #{down_forward.2} parent=39 // pred_fallthru
        _
    $region40: #{down_forward.2} parent=5 // pred_fallthru
      _
    %p1024 = scmp.le.s32.totalorder 2, %s13
    // Predicated region
    $region49: #{down_forward.2} parent=5 // pred_check
      %p1025 = pneg %p1024
    $region50: #{down_forward.2} parent=5 // pred_check_branch
      %1027 = sbr.rel (%p1025) target = $region52
    $region51: #{down_forward.2} parent=5 // pred_region
      %s1028 = ssub.s32 %s13, 2
      // Predicated region
      $region53: #{down_forward.2} parent=51 // pred_check
        %p1029 = pneg %p203
      $region54: #{down_forward.2} parent=51 // pred_check_branch
        %1031 = sbr.rel (%p1029) target = $region56
      $region55: #{down_forward.2} parent=51 // pred_region
        %p1032 = scmp.lt.s32.totalorder %s24, 1
        %s1033 = scalar_select %p1032, %s24, 1
        %p1034 = scmp.lt.s32.totalorder %s25, 3
        %s1035 = scalar_select %p1034, %s25, 3
        %s1036 = smul.addr %s1033, 4
        %s1037 = sadd.s32 %s1035, %s1036
        %s1038 = smul.addr %s1037, 4
        %s1039 = scalar_lea.vmem %s5, %s1038
      $region56: #{down_forward.2} parent=51 // pred_fallthru
        _
      // Predicated region
      $region57: #{down_forward.2} parent=51 // pred_check
        %p1040 = pneg %p231
      $region58: #{down_forward.2} parent=51 // pred_check_branch
        %1042 = sbr.rel (%p1040) target = $region60
      $region59: #{down_forward.2} parent=51 // pred_region
        %p1043 = scmp.lt.s32.totalorder %s24, 1
        %s1044 = scalar_select %p1043, %s24, 1
        %p1045 = scmp.lt.s32.totalorder %s25, 3
        %s1046 = scalar_select %p1045, %s25, 3
        %s1047 = smul.addr %s1044, 4
        %s1048 = sadd.s32 %s1046, %s1047
        %s1049 = smul.addr %s1048, 8
        %s1050 = scalar_lea.vmem %s6, %s1049
      $region60: #{down_forward.2} parent=51 // pred_fallthru
        _
    $region52: #{down_forward.2} parent=5 // pred_fallthru
      _
  $region6: #{down_forward.2} parent=0 // loop_footer
    %s17 = sadd.s32 1, %s13
  $region7: #{down_forward.2} parent=0 // loop_footer_branch
    %12 = sbr.rel target = $region3
  $region8: #{down_forward.2} parent=0 // loop_exit
    _

// kernel: down_forward.3
$region0: #{down_forward.3}
  #allocation0 [shape = 'u32[]', space=smem, size = 0x4, offset = 0x4, fixed_abs, tag = 'smem constant byte address 0x4 - core index']
  #allocation1 [shape = 'u32[144,128]{1,0:T(1,128)}', space=vmem, size = 0x12000, scoped, tag = 'internal scratch']
  %s0 = inlined_call_operand.vmem [shape: bf16[2,8,512], index: 0, kind: input, shape index: {}]
  %s1 = inlined_call_operand.vmem [shape: f32[8,1], index: 1, kind: input, shape index: {}]
  %s2 = inlined_call_operand.vmem [shape: f32[8,1], index: 2, kind: input, shape index: {}]
  %s3 = inlined_call_operand.vmem [shape: f32[2,8,512], index: 3, kind: output, shape index: {}]
  %s4 = sld [smem:[#allocation0]]
  $region45: #{down_forward.3} parent=0
    _
  %s6 = ssub.s32 1, %s4
  %s7 = scalar_select 0, %s6, %s4
  loop: start=0, step=1, limit=4
  $region2: #{down_forward.3} parent=0 // loop_pre_header
    _
  $region3: #{down_forward.3} parent=0 // loop_header
    %s9 = sphi 0, %s13
    %p10 = scmp.ge.s32.totalorder %s9, 4
    %s16 = sphi 0, %s28
    %s17 = sphi 0, %s24
    %s18 = sphi 0, %s16
    %s19 = sphi 0, %s17
    %s20 = sphi 0, %s18
    %s21 = sphi 0, %s19
    %s33 = sphi 0, %s35
    %s36 = sphi 0, %s33
    %s37 = sphi 0, %s36
    %s53 = sphi 0, %s37
    %s57 = sphi 0, %s57
    %s59 = sphi 0, %s57
    %s60 = sphi 0, %s59
    %s74 = sphi 0, %s60
    %s78 = sphi 0, %s78
    %s80 = sphi 0, %s78
    %s81 = sphi 0, %s80
    %s95 = sphi 0, %s81
    %s103 = sphi 0, %s105
    %s106 = sphi 0, %s103
    %s107 = sphi 0, %s106
    %s123 = sphi 0, %s107
  $region4: #{down_forward.3} parent=0 // loop_header_branch
    %12 = sbr.rel (%p10) target = $region8
  $region5: #{down_forward.3} parent=0 // loop_body
    %s14 = ssub.s32 %s9, 1
    %s15 = ssub.s32 %s9, 2
    %s22 = sadd.s32 1, %s17
    %p23 = scmp.ge.s32.totalorder %s22, 1
    %s24 = scalar_select %p23, 0, %s22
    %s25 = sadd.s32 1, %s16
    %s26 = scalar_select %p23, %s25, %s16
    %p27 = scmp.ge.s32.totalorder %s26, 2
    %s28 = scalar_select %p27, 0, %s26
    %s29 = ssub.s32 %s16, %s28
    %s30 = ssub.s32 %s17, %s24
    %s31 = sor.u32 %s29, %s30
    %p32 = scmp.eq.s32.totalorder %s31, 0
    %s34 = sadd.s32 %s33, 1
    %s35 = scalar_select %p32, %s33, %s34
    %p38 = pneg %p32
    %p39 = scmp.eq.s32.totalorder %s9, 1
    %p40 = por %p38, %p39
    %p41 = scmp.ne.s32.totalorder %s33, %s36
    %p42 = scmp.eq.s32.totalorder %s9, 0
    %p43 = por %p41, %p42
    %p44 = scmp.ne.s32.totalorder %s33, %s36
    %p45 = scmp.eq.s32.totalorder %s14, 1
    %p46 = por %p44, %p45
    %p47 = scmp.ne.s32.totalorder %s36, %s37
    %p48 = scmp.eq.s32.totalorder %s14, 0
    %p49 = por %p47, %p48
    %p50 = scmp.ne.s32.totalorder %s36, %s37
    %p51 = scmp.eq.s32.totalorder %s15, 1
    %p52 = por %p50, %p51
    %p54 = scmp.ne.s32.totalorder %s37, %s53
    %p55 = scmp.eq.s32.totalorder %s15, 0
    %p56 = por %p54, %p55
    %s58 = sadd.s32 %s57, 1
    %p61 = scmp.eq.s32.totalorder %s9, 1
    %p62 = scmp.ne.s32.totalorder %s57, %s59
    %p63 = scmp.eq.s32.totalorder %s9, 0
    %p64 = por %p62, %p63
    %p65 = scmp.ne.s32.totalorder %s57, %s59
    %p66 = scmp.eq.s32.totalorder %s14, 1
    %p67 = por %p65, %p66
    %p68 = scmp.ne.s32.totalorder %s59, %s60
    %p69 = scmp.eq.s32.totalorder %s14, 0
    %p70 = por %p68, %p69
    %p71 = scmp.ne.s32.totalorder %s59, %s60
    %p72 = scmp.eq.s32.totalorder %s15, 1
    %p73 = por %p71, %p72
    %p75 = scmp.ne.s32.totalorder %s60, %s74
    %p76 = scmp.eq.s32.totalorder %s15, 0
    %p77 = por %p75, %p76
    %s79 = sadd.s32 %s78, 1
    %p82 = scmp.eq.s32.totalorder %s9, 1
    %p83 = scmp.ne.s32.totalorder %s78, %s80
    %p84 = scmp.eq.s32.totalorder %s9, 0
    %p85 = por %p83, %p84
    %p86 = scmp.ne.s32.totalorder %s78, %s80
    %p87 = scmp.eq.s32.totalorder %s14, 1
    %p88 = por %p86, %p87
    %p89 = scmp.ne.s32.totalorder %s80, %s81
    %p90 = scmp.eq.s32.totalorder %s14, 0
    %p91 = por %p89, %p90
    %p92 = scmp.ne.s32.totalorder %s80, %s81
    %p93 = scmp.eq.s32.totalorder %s15, 1
    %p94 = por %p92, %p93
    %p96 = scmp.ne.s32.totalorder %s81, %s95
    %p97 = scmp.eq.s32.totalorder %s15, 0
    %p98 = por %p96, %p97
    %s99 = ssub.s32 %s16, %s28
    %s100 = ssub.s32 %s17, %s24
    %s101 = sor.u32 %s99, %s100
    %p102 = scmp.eq.s32.totalorder %s101, 0
    %s104 = sadd.s32 %s103, 1
    %s105 = scalar_select %p102, %s103, %s104
    %p108 = pneg %p102
    %p109 = scmp.eq.s32.totalorder %s9, 1
    %p110 = por %p108, %p109
    %p111 = scmp.ne.s32.totalorder %s103, %s106
    %p112 = scmp.eq.s32.totalorder %s9, 0
    %p113 = por %p111, %p112
    %p114 = scmp.ne.s32.totalorder %s103, %s106
    %p115 = scmp.eq.s32.totalorder %s14, 1
    %p116 = por %p114, %p115
    %p117 = scmp.ne.s32.totalorder %s106, %s107
    %p118 = scmp.eq.s32.totalorder %s14, 0
    %p119 = por %p117, %p118
    %p120 = scmp.ne.s32.totalorder %s106, %s107
    %p121 = scmp.eq.s32.totalorder %s15, 1
    %p122 = por %p120, %p121
    %p124 = scmp.ne.s32.totalorder %s107, %s123
    %p125 = scmp.eq.s32.totalorder %s15, 0
    %p126 = por %p124, %p125
    %p127 = scmp.le.s32.totalorder 1, %s9
    %p128 = scmp.lt.s32.totalorder %s9, 3
    %p129 = pnand %p127, %p128
    %p130 = pneg %p129
    // Predicated region
    $region9: #{down_forward.3} parent=5 // pred_check
      _
    $region10: #{down_forward.3} parent=5 // pred_check_branch
      %132 = sbr.rel (%p129) target = $region12
    $region11: #{down_forward.3} parent=5 // pred_region
      %s133 = ssub.s32 %s9, 1
      // Predicated region
      $region13: #{down_forward.3} parent=11 // pred_check
        %p134 = pneg %p70
      $region14: #{down_forward.3} parent=11 // pred_check_branch
        %136 = sbr.rel (%p134) target = $region16
      $region15: #{down_forward.3} parent=11 // pred_region
        _
      $region16: #{down_forward.3} parent=11 // pred_fallthru
        _
      // Predicated region
      $region17: #{down_forward.3} parent=11 // pred_check
        %p137 = pneg %p91
      $region18: #{down_forward.3} parent=11 // pred_check_branch
        %139 = sbr.rel (%p137) target = $region20
      $region19: #{down_forward.3} parent=11 // pred_region
        _
      $region20: #{down_forward.3} parent=11 // pred_fallthru
        _
    $region12: #{down_forward.3} parent=5 // pred_fallthru
      _
    %p140 = scmp.lt.s32.totalorder %s9, 2
    // Predicated region
    $region21: #{down_forward.3} parent=5 // pred_check
      %p141 = pneg %p140
    $region22: #{down_forward.3} parent=5 // pred_check_branch
      %143 = sbr.rel (%p141) target = $region24
    $region23: #{down_forward.3} parent=5 // pred_region
      // Predicated region
      $region25: #{down_forward.3} parent=23 // pred_check
        %p144 = pneg %p43
      $region26: #{down_forward.3} parent=23 // pred_check_branch
        %146 = sbr.rel (%p144) target = $region28
      $region27: #{down_forward.3} parent=23 // pred_region
        %s147 = smul.u32 4, %s17
        %p148 = scmp.lt.s32.totalorder %s16, 1
        %s149 = scalar_select %p148, %s16, 1
        %p150 = scmp.lt.s32.totalorder %s147, 3
        %s151 = scalar_select %p150, %s147, 3
        %s152 = smul.addr %s149, 4
        %s153 = sadd.s32 %s151, %s152
        %s154 = smul.addr %s153, 4
        %s155 = scalar_lea.vmem %s0, %s154
        %s156 = smul.u32 4, %s17
      $region28: #{down_forward.3} parent=23 // pred_fallthru
        _
    $region24: #{down_forward.3} parent=5 // pred_fallthru
      _
    %p157 = scmp.le.s32.totalorder 1, %s9
    %p158 = scmp.lt.s32.totalorder %s9, 3
    %p159 = pnand %p157, %p158
    %p160 = pneg %p159
    // Predicated region
    $region29: #{down_forward.3} parent=5 // pred_check
      _
    $region30: #{down_forward.3} parent=5 // pred_check_branch
      %162 = sbr.rel (%p159) target = $region32
    $region31: #{down_forward.3} parent=5 // pred_region
      %s163 = ssub.s32 %s9, 1
      %s164 = smul.u32 4, %s19
      %p165 = scmp.lt.s32.totalorder %s18, 1
      %s166 = scalar_select %p165, %s18, 1
      %p167 = scmp.lt.s32.totalorder %s164, 3
      %s168 = scalar_select %p167, %s164, 3
      %s169 = smul.addr %s166, 4
      %s170 = sadd.s32 %s168, %s169
      %s171 = smul.addr %s170, 4
      %s172 = scalar_lea.vmem %s0, %s171
      %p173 = pneg %p49
      %p174 = pneg %p46
      %p175 = pneg %p70
      %p176 = pneg %p67
      %p177 = pneg %p91
      %p178 = pneg %p88
      %p179 = pneg %p119
      %p180 = pneg %p116
      %s181 = smul.u32 4, %s19
      %p182 = scmp.lt.s32.totalorder %s18, 1
      %s183 = scalar_select %p182, %s18, 1
      %p184 = scmp.lt.s32.totalorder %s181, 3
      %s185 = scalar_select %p184, %s181, 3
      %s186 = smul.addr %s183, 4
      %s187 = sadd.s32 %s185, %s186
      %s188 = smul.addr %s187, 8
      %s189 = scalar_lea.vmem %s3, %s188
      %s190 = smul.u32 4, %s19
      %p191 = scmp.lt.s32.totalorder %s18, 1
      %s192 = scalar_select %p191, %s18, 1
      %p193 = scmp.lt.s32.totalorder %s190, 3
      %s194 = scalar_select %p193, %s190, 3
      %s195 = smul.addr %s192, 4
      %s196 = sadd.s32 %s194, %s195
      %s197 = smul.addr %s196, 4
      %s198 = scalar_lea.vmem %s0, %s197
      %s199 = smul.u32 4, %s19
      %s200 = smul.u32 4, %s19
      %p201 = scmp.lt.s32.totalorder %s18, 1
      %s202 = scalar_select %p201, %s18, 1
      %p203 = scmp.lt.s32.totalorder %s200, 3
      %s204 = scalar_select %p203, %s200, 3
      %s205 = smul.addr %s202, 4
      %s206 = sadd.s32 %s204, %s205
      %s207 = smul.addr %s206, 8
      %s208 = scalar_lea.vmem %s3, %s207
      %s209 = smul.u32 4, %s19
      %v210 = vld [vmem:[%s198] sm:$0xff]
      %v211 = vld [vmem:[%s198 + $0x8] sm:$0xff]
      %v212 = vunpack.c.l.bf16 %v210
      %v213 = vunpack.c.h.bf16 %v210
      %v214 = vunpack.c.l.bf16 %v211
      %v215 = vunpack.c.h.bf16 %v211
      %v216 = vld [vmem:[%s1] sm:$0xff]
      %218 = vset.pattern.permute.xlu0 0
      %219 = vperm.xlu0 %218, %v216
      %v220 = vpop.permute.xlu0 %219
      %v222 = vmul.f32 %v212, %v220
      %v223 = vmul.f32 %v213, %v220
      %v224 = vmul.f32 %v214, %v220
      %v225 = vmul.f32 %v215, %v220
      %v226 = vld [vmem:[%s2] sm:$0xff]
      %228 = vset.pattern.permute.xlu0 0
      %229 = vperm.xlu0 %228, %v226
      %v230 = vpop.permute.xlu0 %229
      %v232 = vadd.f32 %v222, %v230
      %v233 = vadd.f32 %v223, %v230
      %v234 = vadd.f32 %v224, %v230
      %v235 = vadd.f32 %v225, %v230
      %v236 = vmax.f32 %v232, 0.0
      %v237 = vmax.f32 %v233, 0.0
      %v238 = vmax.f32 %v234, 0.0
      %v239 = vmax.f32 %v235, 0.0
      %240 = vst [vmem:[%s208] sm:$0xff] %v236
      %241 = vst [vmem:[%s208 + $0x8] sm:$0xff] %v237
      %242 = vst [vmem:[%s208 + $0x10] sm:$0xff] %v238
      %243 = vst [vmem:[%s208 + $0x18] sm:$0xff] %v239
      %s244 = smul.u32 4, %s19
      %p245 = scmp.lt.s32.totalorder %s18, 1
      %s246 = scalar_select %p245, %s18, 1
      %p247 = scmp.lt.s32.totalorder %s244, 3
      %s248 = scalar_select %p247, %s244, 3
      %s249 = smul.addr %s246, 4
      %s250 = sadd.s32 %s248, %s249
      %s251 = smul.addr %s250, 8
      %s252 = scalar_lea.vmem %s3, %s251
      // Predicated region
      $region33: #{down_forward.3} parent=31 // pred_check
        %p253 = pneg %p116
      $region34: #{down_forward.3} parent=31 // pred_check_branch
        %255 = sbr.rel (%p253) target = $region36
      $region35: #{down_forward.3} parent=31 // pred_region
        %s256 = smul.u32 4, %s19
      $region36: #{down_forward.3} parent=31 // pred_fallthru
        _
    $region32: #{down_forward.3} parent=5 // pred_fallthru
      _
    %p257 = scmp.le.s32.totalorder 2, %s9
    // Predicated region
    $region37: #{down_forward.3} parent=5 // pred_check
      %p258 = pneg %p257
    $region38: #{down_forward.3} parent=5 // pred_check_branch
      %260 = sbr.rel (%p258) target = $region40
    $region39: #{down_forward.3} parent=5 // pred_region
      %s261 = ssub.s32 %s9, 2
      // Predicated region
      $region41: #{down_forward.3} parent=39 // pred_check
        %p262 = pneg %p122
      $region42: #{down_forward.3} parent=39 // pred_check_branch
        %264 = sbr.rel (%p262) target = $region44
      $region43: #{down_forward.3} parent=39 // pred_region
        %s265 = smul.u32 4, %s21
        %p266 = scmp.lt.s32.totalorder %s20, 1
        %s267 = scalar_select %p266, %s20, 1
        %p268 = scmp.lt.s32.totalorder %s265, 3
        %s269 = scalar_select %p268, %s265, 3
        %s270 = smul.addr %s267, 4
        %s271 = sadd.s32 %s269, %s270
        %s272 = smul.addr %s271, 8
        %s273 = scalar_lea.vmem %s3, %s272
      $region44: #{down_forward.3} parent=39 // pred_fallthru
        _
    $region40: #{down_forward.3} parent=5 // pred_fallthru
      _
  $region6: #{down_forward.3} parent=0 // loop_footer
    %s13 = sadd.s32 1, %s9
  $region7: #{down_forward.3} parent=0 // loop_footer_branch
    %8 = sbr.rel target = $region3
  $region8: #{down_forward.3} parent=0 // loop_exit
    _

</llo_original>
